<compile_context>
chip_gen: v6e
topology: v6e:2x2x1
jax: 0.10.0
libtpu: 0.0.40
codegen_flags: <defaults>
</compile_context>

<pallas_src>
import jax
import jax.numpy as jnp
from jax.experimental import pallas as pl
from jax.experimental.pallas import tpu as pltpu


# ----------------------------------------------------------------------------
# Kernel
# ----------------------------------------------------------------------------
def _make_siren_kernel(n_linear: int):
    """Pallas kernel: full SIREN MLP on one lane-tile of x^T (particles on lanes).

    omega is already folded into the sine-layer weights/biases, so the body is
    just  h <- sin(Wt @ h + bt)  for the sine layers and a plain affine for the
    outermost linear layer.
    """

    def kernel(x_ref, *rest):
        o_ref = rest[-1]
        params = rest[:-1]  # interleaved (Wt0, bt0, Wt1, bt1, ..., WtL-1, btL-1)
        h = x_ref[...].astype(jnp.float32)          # (d_in, tile_n)
        for i in range(n_linear):
            wt = params[2 * i][...]                 # (d_out_i, d_in_i), omega-folded
            bt = params[2 * i + 1][...]             # (d_out_i, 1)
            z = jnp.dot(wt, h, preferred_element_type=jnp.float32) + bt
            h = jnp.sin(z) if i < n_linear - 1 else z
        o_ref[...] = h.astype(o_ref.dtype)

    return kernel


# ----------------------------------------------------------------------------
# Parameter prep (one-time transform): fold omega, transpose to (d_out, d_in)
# ----------------------------------------------------------------------------
def prepare_siren_params(weights, biases, omega):
    """weights[i]:(di,do), biases[i]:(1,do)  ->  (Wt list (do,di), bt list (do,1)).

    omega is folded into every layer except the outermost linear one.
    """
    n_linear = len(weights)
    wts, bts = [], []
    for i, (w, b) in enumerate(zip(weights, biases)):
        scale = jnp.float32(omega) if i < n_linear - 1 else jnp.float32(1.0)
        wts.append(jnp.asarray(w * scale, jnp.float32).T)   # (do, di)
        bts.append(jnp.asarray(b * scale, jnp.float32).T)   # (do, 1)
    return wts, bts


def _choose_tile(n_pad: int, tile_n: int) -> int:
    """Pick a lane tile: multiple of 128, divides n_pad, >=2 grid steps if possible."""
    tile = min(max(128, (tile_n // 128) * 128), n_pad)
    while n_pad % tile:
        tile -= 128                      # n_pad is a multiple of 128 -> terminates
    # keep at least 2 grid steps so the parallel axis can shard over v7x's 2 TCs
    if tile == n_pad and n_pad >= 256 and (n_pad // 2) % 128 == 0:
        tile = n_pad // 2
    return tile


# ----------------------------------------------------------------------------
# Wrapper
# ----------------------------------------------------------------------------
def siren_pallas(x, wts, bts, *, tile_n=1024):
    """Run the SIREN MLP on x:(N, d_in) via one pallas_call tiled over particles.

    wts/bts are the prepared (omega-folded, transposed) parameters from
    prepare_siren_params.  Returns (N, d_out).
    """
    n, d_in = x.shape
    d_out = wts[-1].shape[0]
    n_linear = len(wts)

    # Particles on lanes: x^T is (d_in, N); pad N up to a multiple of 128.
    n_pad = -(-n // 128) * 128
    xt = x.T
    if n_pad != n:
        xt = jnp.pad(xt, ((0, 0), (0, n_pad - n)))

    tile = _choose_tile(n_pad, tile_n)
    kernel = _make_siren_kernel(n_linear)

    # x^T tiled over lanes; every weight/bias passed whole (block 0).
    in_specs = [pl.BlockSpec((d_in, tile), lambda i: (0, i))]
    flat_params = []
    for wt, bt in zip(wts, bts):
        in_specs.append(pl.BlockSpec(wt.shape, lambda i: (0, 0)))
        in_specs.append(pl.BlockSpec(bt.shape, lambda i: (0, 0)))
        flat_params.append(wt)
        flat_params.append(bt)

    out_spec = pl.BlockSpec((d_out, tile), lambda i: (0, i))

    yt = pl.pallas_call(
        kernel,
        out_shape=jax.ShapeDtypeStruct((d_out, n_pad), x.dtype),
        grid_spec=pltpu.PrefetchScalarGridSpec(
            num_scalar_prefetch=0,
            grid=(n_pad // tile,),
            in_specs=in_specs,
            out_specs=out_spec,
        ),
        compiler_params=pltpu.CompilerParams(
            dimension_semantics=("parallel",),
        ),
    )(xt, *flat_params)

    # Layout plumbing back to the module's (N, d_out) contract.
    return yt[:, :n].T


# ----------------------------------------------------------------------------
# Init + reference
# ----------------------------------------------------------------------------
def init_siren_params(key, in_features, hidden_features, hidden_layers,
                      out_features, first_omega_0, hidden_omega_0):
    """Deterministic SIREN init (matches the reference Siren init scheme)."""
    dims_in = [in_features] + [hidden_features] * (hidden_layers + 1)
    dims_out = [hidden_features] * (hidden_layers + 1) + [out_features]
    weights, biases = [], []
    for li, (di, do) in enumerate(zip(dims_in, dims_out)):
        key, kw, kb = jax.random.split(key, 3)
        if li == 0:
            bound = 1.0 / di
        else:
            bound = (6.0 / di) ** 0.5 / hidden_omega_0
        w = jax.random.uniform(kw, (di, do), jnp.float32, -bound, bound)
        # nn.Linear default bias init: uniform(-1/sqrt(fan_in), 1/sqrt(fan_in))
        b_bound = 1.0 / (di ** 0.5)
        b = jax.random.uniform(kb, (1, do), jnp.float32, -b_bound, b_bound)
        weights.append(w)
        biases.append(b)
    return weights, biases


def siren_reference(x, weights, biases, *, omega):
    """Plain-JAX reference for correctness checking (unfolded params)."""
    h = x
    n_linear = len(weights)
    for i, (w, b) in enumerate(zip(weights, biases)):
        z = h @ w + b
        h = jnp.sin(omega * z) if i < n_linear - 1 else z
    return h


# ----------------------------------------------------------------------------
# Module equivalent
# ----------------------------------------------------------------------------
class InteractionMPMPallas:
    """JAX/Pallas equivalent of Interaction_MPM (forward = siren(data.x))."""

    def __init__(self, *, n_dataset, n_particles, embedding_dim,
                 input_size_nnr, n_layers_nnr, hidden_dim_nnr,
                 output_size_nnr, omega, key, tile_n=1024):
        self.omega = float(omega)
        self.tile_n = int(tile_n)
        k_siren, _k_a = jax.random.split(key)
        self.weights, self.biases = init_siren_params(
            k_siren, input_size_nnr, hidden_dim_nnr, n_layers_nnr,
            output_size_nnr, omega, omega)
        # One-time transform: fold omega + transpose for the lane-dense kernel.
        self.wts, self.bts = prepare_siren_params(
            self.weights, self.biases, self.omega)
        # self.a: unused in forward, kept for parity with the PyTorch module.
        self.a = jnp.ones((n_dataset, n_particles, embedding_dim), jnp.float32)

    def forward(self, x):
        return siren_pallas(x, self.wts, self.bts, tile_n=self.tile_n)


# ----------------------------------------------------------------------------
# Demo / self-check
# ----------------------------------------------------------------------------
if __name__ == "__main__":
    key = jax.random.PRNGKey(0)
    k_param, k_x = jax.random.split(key)

    # Small config consistent with the module's hyperparameters.
    # TODO(synk): this tiled kernel pays off at n_particles ~1e5-1e6; at tiny N
    # fused XLA would be just as good — kept in Pallas per the exercise spec.
    n_particles = 256          # simulation_config.n_particles
    input_size_nnr = 3         # model_config.input_size_nnr
    n_layers_nnr = 3           # model_config.n_layers_nnr
    hidden_dim_nnr = 32        # model_config.hidden_dim_nnr
    output_size_nnr = 2        # model_config.output_size_nnr
    omega = 30.0               # model_config.omega
    embedding_dim = 2
    n_dataset = 2

    model = InteractionMPMPallas(
        n_dataset=n_dataset, n_particles=n_particles,
        embedding_dim=embedding_dim, input_size_nnr=input_size_nnr,
        n_layers_nnr=n_layers_nnr, hidden_dim_nnr=hidden_dim_nnr,
        output_size_nnr=output_size_nnr, omega=omega, key=k_param)

    # data.x : (n_particles, input_size_nnr)
    x = jax.random.uniform(k_x, (n_particles, input_size_nnr), jnp.float32,
                           -1.0, 1.0)

    out = model.forward(x)
    out = jax.block_until_ready(out)

    ref = siren_reference(x, model.weights, model.biases, omega=omega)
    assert out.shape == (n_particles, output_size_nnr)
    assert jnp.allclose(out, ref, atol=2e-4, rtol=2e-4), "mismatch vs reference"

    print("KERNEL_OK")
</pallas_src>

<mosaic_0001>
module attributes {stable_mosaic.version = 11 : i64} {
  func.func @kernel(%arg0: i32, %arg1: memref<3x128xf32, #tpu.memory_space<vmem>>, %arg2: memref<32x3xf32, #tpu.memory_space<vmem>>, %arg3: memref<32x1xf32, #tpu.memory_space<vmem>>, %arg4: memref<32x32xf32, #tpu.memory_space<vmem>>, %arg5: memref<32x1xf32, #tpu.memory_space<vmem>>, %arg6: memref<32x32xf32, #tpu.memory_space<vmem>>, %arg7: memref<32x1xf32, #tpu.memory_space<vmem>>, %arg8: memref<32x32xf32, #tpu.memory_space<vmem>>, %arg9: memref<32x1xf32, #tpu.memory_space<vmem>>, %arg10: memref<2x32xf32, #tpu.memory_space<vmem>>, %arg11: memref<2x1xf32, #tpu.memory_space<vmem>>, %arg12: memref<2x128xf32, #tpu.memory_space<vmem>>) attributes {dimension_semantics = [#tpu.dimension_semantics<parallel>], iteration_bounds = array<i64: 2>, scalar_prefetch = 0 : i64, scratch_operands = 0 : i64, tpu.core_type = #tpu.core_type<tc>, window_params = [{transform_indices = @transform_0, window_bounds = array<i64: 3, 128>}, {pipeline_mode = #tpu.pipeline_mode<synchronous>, transform_indices = @transform_1, window_bounds = array<i64: 32, 3>}, {pipeline_mode = #tpu.pipeline_mode<synchronous>, transform_indices = @transform_2, window_bounds = array<i64: 32, 1>}, {pipeline_mode = #tpu.pipeline_mode<synchronous>, transform_indices = @transform_3, window_bounds = array<i64: 32, 32>}, {pipeline_mode = #tpu.pipeline_mode<synchronous>, transform_indices = @transform_4, window_bounds = array<i64: 32, 1>}, {pipeline_mode = #tpu.pipeline_mode<synchronous>, transform_indices = @transform_5, window_bounds = array<i64: 32, 32>}, {pipeline_mode = #tpu.pipeline_mode<synchronous>, transform_indices = @transform_6, window_bounds = array<i64: 32, 1>}, {pipeline_mode = #tpu.pipeline_mode<synchronous>, transform_indices = @transform_7, window_bounds = array<i64: 32, 32>}, {pipeline_mode = #tpu.pipeline_mode<synchronous>, transform_indices = @transform_8, window_bounds = array<i64: 32, 1>}, {pipeline_mode = #tpu.pipeline_mode<synchronous>, transform_indices = @transform_9, window_bounds = array<i64: 2, 32>}, {pipeline_mode = #tpu.pipeline_mode<synchronous>, transform_indices = @transform_10, window_bounds = array<i64: 2, 1>}, {transform_indices = @transform_11, window_bounds = array<i64: 2, 128>}]} {
    %c0 = arith.constant 0 : index
    %c0_0 = arith.constant 0 : index
    %0 = vector.load %arg1[%c0, %c0_0] : memref<3x128xf32, #tpu.memory_space<vmem>>, vector<3x128xf32>
    %c0_1 = arith.constant 0 : index
    %c0_2 = arith.constant 0 : index
    %1 = vector.load %arg2[%c0_1, %c0_2] : memref<32x3xf32, #tpu.memory_space<vmem>>, vector<32x3xf32>
    %c0_3 = arith.constant 0 : index
    %c0_4 = arith.constant 0 : index
    %2 = vector.load %arg3[%c0_3, %c0_4] : memref<32x1xf32, #tpu.memory_space<vmem>>, vector<32x1xf32>
    %cst = arith.constant dense<0.000000e+00> : vector<32x128xf32>
    %3 = tpu.matmul %1, %0, %cst {dimension_numbers = #tpu.dot_dimension_numbers<[1], [0], [0], [1], [0, 0, 1, 1], [], []>} : vector<32x3xf32>, vector<3x128xf32>, vector<32x128xf32> -> vector<32x128xf32>
    %4 = vector.broadcast %2 : vector<32x1xf32> to vector<32x128xf32>
    %5 = arith.addf %3, %4 : vector<32x128xf32>
    %6 = math.sin %5 : vector<32x128xf32>
    %c0_5 = arith.constant 0 : index
    %c0_6 = arith.constant 0 : index
    %7 = vector.load %arg4[%c0_5, %c0_6] : memref<32x32xf32, #tpu.memory_space<vmem>>, vector<32x32xf32>
    %c0_7 = arith.constant 0 : index
    %c0_8 = arith.constant 0 : index
    %8 = vector.load %arg5[%c0_7, %c0_8] : memref<32x1xf32, #tpu.memory_space<vmem>>, vector<32x1xf32>
    %cst_9 = arith.constant dense<0.000000e+00> : vector<32x128xf32>
    %9 = tpu.matmul %7, %6, %cst_9 {dimension_numbers = #tpu.dot_dimension_numbers<[1], [0], [0], [1], [0, 0, 1, 1], [], []>} : vector<32x32xf32>, vector<32x128xf32>, vector<32x128xf32> -> vector<32x128xf32>
    %10 = vector.broadcast %8 : vector<32x1xf32> to vector<32x128xf32>
    %11 = arith.addf %9, %10 : vector<32x128xf32>
    %12 = math.sin %11 : vector<32x128xf32>
    %c0_10 = arith.constant 0 : index
    %c0_11 = arith.constant 0 : index
    %13 = vector.load %arg6[%c0_10, %c0_11] : memref<32x32xf32, #tpu.memory_space<vmem>>, vector<32x32xf32>
    %c0_12 = arith.constant 0 : index
    %c0_13 = arith.constant 0 : index
    %14 = vector.load %arg7[%c0_12, %c0_13] : memref<32x1xf32, #tpu.memory_space<vmem>>, vector<32x1xf32>
    %cst_14 = arith.constant dense<0.000000e+00> : vector<32x128xf32>
    %15 = tpu.matmul %13, %12, %cst_14 {dimension_numbers = #tpu.dot_dimension_numbers<[1], [0], [0], [1], [0, 0, 1, 1], [], []>} : vector<32x32xf32>, vector<32x128xf32>, vector<32x128xf32> -> vector<32x128xf32>
    %16 = vector.broadcast %14 : vector<32x1xf32> to vector<32x128xf32>
    %17 = arith.addf %15, %16 : vector<32x128xf32>
    %18 = math.sin %17 : vector<32x128xf32>
    %c0_15 = arith.constant 0 : index
    %c0_16 = arith.constant 0 : index
    %19 = vector.load %arg8[%c0_15, %c0_16] : memref<32x32xf32, #tpu.memory_space<vmem>>, vector<32x32xf32>
    %c0_17 = arith.constant 0 : index
    %c0_18 = arith.constant 0 : index
    %20 = vector.load %arg9[%c0_17, %c0_18] : memref<32x1xf32, #tpu.memory_space<vmem>>, vector<32x1xf32>
    %cst_19 = arith.constant dense<0.000000e+00> : vector<32x128xf32>
    %21 = tpu.matmul %19, %18, %cst_19 {dimension_numbers = #tpu.dot_dimension_numbers<[1], [0], [0], [1], [0, 0, 1, 1], [], []>} : vector<32x32xf32>, vector<32x128xf32>, vector<32x128xf32> -> vector<32x128xf32>
    %22 = vector.broadcast %20 : vector<32x1xf32> to vector<32x128xf32>
    %23 = arith.addf %21, %22 : vector<32x128xf32>
    %24 = math.sin %23 : vector<32x128xf32>
    %c0_20 = arith.constant 0 : index
    %c0_21 = arith.constant 0 : index
    %25 = vector.load %arg10[%c0_20, %c0_21] : memref<2x32xf32, #tpu.memory_space<vmem>>, vector<2x32xf32>
    %c0_22 = arith.constant 0 : index
    %c0_23 = arith.constant 0 : index
    %26 = vector.load %arg11[%c0_22, %c0_23] : memref<2x1xf32, #tpu.memory_space<vmem>>, vector<2x1xf32>
    %cst_24 = arith.constant dense<0.000000e+00> : vector<2x128xf32>
    %27 = tpu.matmul %25, %24, %cst_24 {dimension_numbers = #tpu.dot_dimension_numbers<[1], [0], [0], [1], [0, 0, 1, 1], [], []>} : vector<2x32xf32>, vector<32x128xf32>, vector<2x128xf32> -> vector<2x128xf32>
    %28 = vector.broadcast %26 : vector<2x1xf32> to vector<2x128xf32>
    %29 = arith.addf %27, %28 : vector<2x128xf32>
    %c0_25 = arith.constant 0 : index
    %c0_26 = arith.constant 0 : index
    %30 = vector.load %arg12[%c0_25, %c0_26] : memref<2x128xf32, #tpu.memory_space<vmem>>, vector<2x128xf32>
    tpu.vector_store %arg12[%c0_25, %c0_26], %29 {strides = array<i32>} : memref<2x128xf32, #tpu.memory_space<vmem>>, vector<2x128xf32>,
    return
  }
  func.func @transform_0(%arg0: i32) -> (i32, i32) {
    %c0_i32 = arith.constant 0 : i32
    %c0_i32_0 = arith.constant 0 : i32
    return %c0_i32, %arg0 : i32, i32
  }
  func.func @transform_1(%arg0: i32) -> (i32, i32) {
    %c0_i32 = arith.constant 0 : i32
    %c0_i32_0 = arith.constant 0 : i32
    %c0_i32_1 = arith.constant 0 : i32
    return %c0_i32, %c0_i32_0 : i32, i32
  }
  func.func @transform_2(%arg0: i32) -> (i32, i32) {
    %c0_i32 = arith.constant 0 : i32
    %c0_i32_0 = arith.constant 0 : i32
    %c0_i32_1 = arith.constant 0 : i32
    return %c0_i32, %c0_i32_0 : i32, i32
  }
  func.func @transform_3(%arg0: i32) -> (i32, i32) {
    %c0_i32 = arith.constant 0 : i32
    %c0_i32_0 = arith.constant 0 : i32
    %c0_i32_1 = arith.constant 0 : i32
    return %c0_i32, %c0_i32_0 : i32, i32
  }
  func.func @transform_4(%arg0: i32) -> (i32, i32) {
    %c0_i32 = arith.constant 0 : i32
    %c0_i32_0 = arith.constant 0 : i32
    %c0_i32_1 = arith.constant 0 : i32
    return %c0_i32, %c0_i32_0 : i32, i32
  }
  func.func @transform_5(%arg0: i32) -> (i32, i32) {
    %c0_i32 = arith.constant 0 : i32
    %c0_i32_0 = arith.constant 0 : i32
    %c0_i32_1 = arith.constant 0 : i32
    return %c0_i32, %c0_i32_0 : i32, i32
  }
  func.func @transform_6(%arg0: i32) -> (i32, i32) {
    %c0_i32 = arith.constant 0 : i32
    %c0_i32_0 = arith.constant 0 : i32
    %c0_i32_1 = arith.constant 0 : i32
    return %c0_i32, %c0_i32_0 : i32, i32
  }
  func.func @transform_7(%arg0: i32) -> (i32, i32) {
    %c0_i32 = arith.constant 0 : i32
    %c0_i32_0 = arith.constant 0 : i32
    %c0_i32_1 = arith.constant 0 : i32
    return %c0_i32, %c0_i32_0 : i32, i32
  }
  func.func @transform_8(%arg0: i32) -> (i32, i32) {
    %c0_i32 = arith.constant 0 : i32
    %c0_i32_0 = arith.constant 0 : i32
    %c0_i32_1 = arith.constant 0 : i32
    return %c0_i32, %c0_i32_0 : i32, i32
  }
  func.func @transform_9(%arg0: i32) -> (i32, i32) {
    %c0_i32 = arith.constant 0 : i32
    %c0_i32_0 = arith.constant 0 : i32
    %c0_i32_1 = arith.constant 0 : i32
    return %c0_i32, %c0_i32_0 : i32, i32
  }
  func.func @transform_10(%arg0: i32) -> (i32, i32) {
    %c0_i32 = arith.constant 0 : i32
    %c0_i32_0 = arith.constant 0 : i32
    %c0_i32_1 = arith.constant 0 : i32
    return %c0_i32, %c0_i32_0 : i32, i32
  }
  func.func @transform_11(%arg0: i32) -> (i32, i32) {
    %c0_i32 = arith.constant 0 : i32
    %c0_i32_0 = arith.constant 0 : i32
    return %c0_i32, %arg0 : i32, i32
  }
}

</mosaic_0001>

<llo_original>
// kernel: tpu_custom_call.1
$region0: #{tpu_custom_call.1}
  #allocation0 [shape = 'u32[]', space=smem, size = 0x4, offset = 0x4, fixed_abs, tag = 'smem constant byte address 0x4 - core index']
  #allocation1 [shape = 'u32[144,128]{1,0:T(1,128)}', space=vmem, size = 0x12000, scoped, tag = 'internal scratch']
  %s0 = inlined_call_operand.vmem [shape: f32[3,256], index: 0, kind: input, shape index: {}]
  %s1 = inlined_call_operand.vmem [shape: f32[32,3], index: 1, kind: input, shape index: {}]
  %s2 = inlined_call_operand.vmem [shape: f32[32,1], index: 2, kind: input, shape index: {}]
  %s3 = inlined_call_operand.vmem [shape: f32[32,32], index: 3, kind: input, shape index: {}]
  %s4 = inlined_call_operand.vmem [shape: f32[32,1], index: 4, kind: input, shape index: {}]
  %s5 = inlined_call_operand.vmem [shape: f32[32,32], index: 5, kind: input, shape index: {}]
  %s6 = inlined_call_operand.vmem [shape: f32[32,1], index: 6, kind: input, shape index: {}]
  %s7 = inlined_call_operand.vmem [shape: f32[32,32], index: 7, kind: input, shape index: {}]
  %s8 = inlined_call_operand.vmem [shape: f32[32,1], index: 8, kind: input, shape index: {}]
  %s9 = inlined_call_operand.vmem [shape: f32[2,32], index: 9, kind: input, shape index: {}]
  %s10 = inlined_call_operand.vmem [shape: f32[2,1], index: 10, kind: input, shape index: {}]
  %s11 = inlined_call_operand.hbm [shape: f32[2,256], index: 11, kind: output, shape index: {}]
  %s12 = sld [smem:[#allocation0]]
  $region77: #{tpu_custom_call.1} parent=0
    _
  %s14 = ssub.s32 1, %s12
  %s15 = scalar_select 0, %s14, %s12
  $region1: #{tpu_custom_call.1} parent=0
    #allocation2 [shape = 'u8[2048]{0}', space=vmem, size = 0x800, scoped, tag = 'output window, operand 0']
    #allocation3 [shape = 's32[2]{0}', space=sflag, size = 0x8, scoped, tag = 'scoped memory for tpu_custom_call.1']
    %16 = vsyncpa [#allocation3], 0
    %s17 = scalar_lea.sflag [#allocation3], 1
    %18 = vsyncpa %s17, 0
    loop: start=0, step=1, limit=4
    $region2: #{tpu_custom_call.1} parent=1 // loop_pre_header
      _
    $region3: #{tpu_custom_call.1} parent=1 // loop_header
      %s20 = sphi 0, %s24
      %p21 = scmp.ge.s32.totalorder %s20, 4
      %s30 = sphi 0, %s32
      %s33 = sphi 0, %s30
      %s34 = sphi 0, %s33
      %s50 = sphi 0, %s34
      %s54 = sphi 0, %s54
      %s56 = sphi 0, %s54
      %s57 = sphi 0, %s56
      %s71 = sphi 0, %s57
      %s75 = sphi 0, %s75
      %s77 = sphi 0, %s75
      %s78 = sphi 0, %s77
      %s92 = sphi 0, %s78
      %s96 = sphi 0, %s96
      %s98 = sphi 0, %s96
      %s99 = sphi 0, %s98
      %s113 = sphi 0, %s99
      %s117 = sphi 0, %s117
      %s119 = sphi 0, %s117
      %s120 = sphi 0, %s119
      %s134 = sphi 0, %s120
      %s138 = sphi 0, %s138
      %s140 = sphi 0, %s138
      %s141 = sphi 0, %s140
      %s155 = sphi 0, %s141
      %s159 = sphi 0, %s159
      %s161 = sphi 0, %s159
      %s162 = sphi 0, %s161
      %s176 = sphi 0, %s162
      %s180 = sphi 0, %s180
      %s182 = sphi 0, %s180
      %s183 = sphi 0, %s182
      %s197 = sphi 0, %s183
      %s201 = sphi 0, %s201
      %s203 = sphi 0, %s201
      %s204 = sphi 0, %s203
      %s218 = sphi 0, %s204
      %s222 = sphi 0, %s222
      %s224 = sphi 0, %s222
      %s225 = sphi 0, %s224
      %s239 = sphi 0, %s225
      %s243 = sphi 0, %s243
      %s245 = sphi 0, %s243
      %s246 = sphi 0, %s245
      %s260 = sphi 0, %s246
      %s266 = sphi 0, %s268
      %s269 = sphi 0, %s266
      %s270 = sphi 0, %s269
      %s286 = sphi 0, %s270
    $region4: #{tpu_custom_call.1} parent=1 // loop_header_branch
      %23 = sbr.rel (%p21) target = $region8
    $region5: #{tpu_custom_call.1} parent=1 // loop_body
      %s25 = ssub.s32 %s20, 1
      %s26 = ssub.s32 %s20, 2
      %s27 = sadd.s32 %s20, 1
      %s28 = ssub.s32 %s20, %s27
      %p29 = scmp.eq.s32.totalorder %s28, 0
      %s31 = sadd.s32 %s30, 1
      %s32 = scalar_select %p29, %s30, %s31
      %p35 = pneg %p29
      %p36 = scmp.eq.s32.totalorder %s20, 1
      %p37 = por %p35, %p36
      %p38 = scmp.ne.s32.totalorder %s30, %s33
      %p39 = scmp.eq.s32.totalorder %s20, 0
      %p40 = por %p38, %p39
      %p41 = scmp.ne.s32.totalorder %s30, %s33
      %p42 = scmp.eq.s32.totalorder %s25, 1
      %p43 = por %p41, %p42
      %p44 = scmp.ne.s32.totalorder %s33, %s34
      %p45 = scmp.eq.s32.totalorder %s25, 0
      %p46 = por %p44, %p45
      %p47 = scmp.ne.s32.totalorder %s33, %s34
      %p48 = scmp.eq.s32.totalorder %s26, 1
      %p49 = por %p47, %p48
      %p51 = scmp.ne.s32.totalorder %s34, %s50
      %p52 = scmp.eq.s32.totalorder %s26, 0
      %p53 = por %p51, %p52
      %s55 = sadd.s32 %s54, 1
      %p58 = scmp.eq.s32.totalorder %s20, 1
      %p59 = scmp.ne.s32.totalorder %s54, %s56
      %p60 = scmp.eq.s32.totalorder %s20, 0
      %p61 = por %p59, %p60
      %p62 = scmp.ne.s32.totalorder %s54, %s56
      %p63 = scmp.eq.s32.totalorder %s25, 1
      %p64 = por %p62, %p63
      %p65 = scmp.ne.s32.totalorder %s56, %s57
      %p66 = scmp.eq.s32.totalorder %s25, 0
      %p67 = por %p65, %p66
      %p68 = scmp.ne.s32.totalorder %s56, %s57
      %p69 = scmp.eq.s32.totalorder %s26, 1
      %p70 = por %p68, %p69
      %p72 = scmp.ne.s32.totalorder %s57, %s71
      %p73 = scmp.eq.s32.totalorder %s26, 0
      %p74 = por %p72, %p73
      %s76 = sadd.s32 %s75, 1
      %p79 = scmp.eq.s32.totalorder %s20, 1
      %p80 = scmp.ne.s32.totalorder %s75, %s77
      %p81 = scmp.eq.s32.totalorder %s20, 0
      %p82 = por %p80, %p81
      %p83 = scmp.ne.s32.totalorder %s75, %s77
      %p84 = scmp.eq.s32.totalorder %s25, 1
      %p85 = por %p83, %p84
      %p86 = scmp.ne.s32.totalorder %s77, %s78
      %p87 = scmp.eq.s32.totalorder %s25, 0
      %p88 = por %p86, %p87
      %p89 = scmp.ne.s32.totalorder %s77, %s78
      %p90 = scmp.eq.s32.totalorder %s26, 1
      %p91 = por %p89, %p90
      %p93 = scmp.ne.s32.totalorder %s78, %s92
      %p94 = scmp.eq.s32.totalorder %s26, 0
      %p95 = por %p93, %p94
      %s97 = sadd.s32 %s96, 1
      %p100 = scmp.eq.s32.totalorder %s20, 1
      %p101 = scmp.ne.s32.totalorder %s96, %s98
      %p102 = scmp.eq.s32.totalorder %s20, 0
      %p103 = por %p101, %p102
      %p104 = scmp.ne.s32.totalorder %s96, %s98
      %p105 = scmp.eq.s32.totalorder %s25, 1
      %p106 = por %p104, %p105
      %p107 = scmp.ne.s32.totalorder %s98, %s99
      %p108 = scmp.eq.s32.totalorder %s25, 0
      %p109 = por %p107, %p108
      %p110 = scmp.ne.s32.totalorder %s98, %s99
      %p111 = scmp.eq.s32.totalorder %s26, 1
      %p112 = por %p110, %p111
      %p114 = scmp.ne.s32.totalorder %s99, %s113
      %p115 = scmp.eq.s32.totalorder %s26, 0
      %p116 = por %p114, %p115
      %s118 = sadd.s32 %s117, 1
      %p121 = scmp.eq.s32.totalorder %s20, 1
      %p122 = scmp.ne.s32.totalorder %s117, %s119
      %p123 = scmp.eq.s32.totalorder %s20, 0
      %p124 = por %p122, %p123
      %p125 = scmp.ne.s32.totalorder %s117, %s119
      %p126 = scmp.eq.s32.totalorder %s25, 1
      %p127 = por %p125, %p126
      %p128 = scmp.ne.s32.totalorder %s119, %s120
      %p129 = scmp.eq.s32.totalorder %s25, 0
      %p130 = por %p128, %p129
      %p131 = scmp.ne.s32.totalorder %s119, %s120
      %p132 = scmp.eq.s32.totalorder %s26, 1
      %p133 = por %p131, %p132
      %p135 = scmp.ne.s32.totalorder %s120, %s134
      %p136 = scmp.eq.s32.totalorder %s26, 0
      %p137 = por %p135, %p136
      %s139 = sadd.s32 %s138, 1
      %p142 = scmp.eq.s32.totalorder %s20, 1
      %p143 = scmp.ne.s32.totalorder %s138, %s140
      %p144 = scmp.eq.s32.totalorder %s20, 0
      %p145 = por %p143, %p144
      %p146 = scmp.ne.s32.totalorder %s138, %s140
      %p147 = scmp.eq.s32.totalorder %s25, 1
      %p148 = por %p146, %p147
      %p149 = scmp.ne.s32.totalorder %s140, %s141
      %p150 = scmp.eq.s32.totalorder %s25, 0
      %p151 = por %p149, %p150
      %p152 = scmp.ne.s32.totalorder %s140, %s141
      %p153 = scmp.eq.s32.totalorder %s26, 1
      %p154 = por %p152, %p153
      %p156 = scmp.ne.s32.totalorder %s141, %s155
      %p157 = scmp.eq.s32.totalorder %s26, 0
      %p158 = por %p156, %p157
      %s160 = sadd.s32 %s159, 1
      %p163 = scmp.eq.s32.totalorder %s20, 1
      %p164 = scmp.ne.s32.totalorder %s159, %s161
      %p165 = scmp.eq.s32.totalorder %s20, 0
      %p166 = por %p164, %p165
      %p167 = scmp.ne.s32.totalorder %s159, %s161
      %p168 = scmp.eq.s32.totalorder %s25, 1
      %p169 = por %p167, %p168
      %p170 = scmp.ne.s32.totalorder %s161, %s162
      %p171 = scmp.eq.s32.totalorder %s25, 0
      %p172 = por %p170, %p171
      %p173 = scmp.ne.s32.totalorder %s161, %s162
      %p174 = scmp.eq.s32.totalorder %s26, 1
      %p175 = por %p173, %p174
      %p177 = scmp.ne.s32.totalorder %s162, %s176
      %p178 = scmp.eq.s32.totalorder %s26, 0
      %p179 = por %p177, %p178
      %s181 = sadd.s32 %s180, 1
      %p184 = scmp.eq.s32.totalorder %s20, 1
      %p185 = scmp.ne.s32.totalorder %s180, %s182
      %p186 = scmp.eq.s32.totalorder %s20, 0
      %p187 = por %p185, %p186
      %p188 = scmp.ne.s32.totalorder %s180, %s182
      %p189 = scmp.eq.s32.totalorder %s25, 1
      %p190 = por %p188, %p189
      %p191 = scmp.ne.s32.totalorder %s182, %s183
      %p192 = scmp.eq.s32.totalorder %s25, 0
      %p193 = por %p191, %p192
      %p194 = scmp.ne.s32.totalorder %s182, %s183
      %p195 = scmp.eq.s32.totalorder %s26, 1
      %p196 = por %p194, %p195
      %p198 = scmp.ne.s32.totalorder %s183, %s197
      %p199 = scmp.eq.s32.totalorder %s26, 0
      %p200 = por %p198, %p199
      %s202 = sadd.s32 %s201, 1
      %p205 = scmp.eq.s32.totalorder %s20, 1
      %p206 = scmp.ne.s32.totalorder %s201, %s203
      %p207 = scmp.eq.s32.totalorder %s20, 0
      %p208 = por %p206, %p207
      %p209 = scmp.ne.s32.totalorder %s201, %s203
      %p210 = scmp.eq.s32.totalorder %s25, 1
      %p211 = por %p209, %p210
      %p212 = scmp.ne.s32.totalorder %s203, %s204
      %p213 = scmp.eq.s32.totalorder %s25, 0
      %p214 = por %p212, %p213
      %p215 = scmp.ne.s32.totalorder %s203, %s204
      %p216 = scmp.eq.s32.totalorder %s26, 1
      %p217 = por %p215, %p216
      %p219 = scmp.ne.s32.totalorder %s204, %s218
      %p220 = scmp.eq.s32.totalorder %s26, 0
      %p221 = por %p219, %p220
      %s223 = sadd.s32 %s222, 1
      %p226 = scmp.eq.s32.totalorder %s20, 1
      %p227 = scmp.ne.s32.totalorder %s222, %s224
      %p228 = scmp.eq.s32.totalorder %s20, 0
      %p229 = por %p227, %p228
      %p230 = scmp.ne.s32.totalorder %s222, %s224
      %p231 = scmp.eq.s32.totalorder %s25, 1
      %p232 = por %p230, %p231
      %p233 = scmp.ne.s32.totalorder %s224, %s225
      %p234 = scmp.eq.s32.totalorder %s25, 0
      %p235 = por %p233, %p234
      %p236 = scmp.ne.s32.totalorder %s224, %s225
      %p237 = scmp.eq.s32.totalorder %s26, 1
      %p238 = por %p236, %p237
      %p240 = scmp.ne.s32.totalorder %s225, %s239
      %p241 = scmp.eq.s32.totalorder %s26, 0
      %p242 = por %p240, %p241
      %s244 = sadd.s32 %s243, 1
      %p247 = scmp.eq.s32.totalorder %s20, 1
      %p248 = scmp.ne.s32.totalorder %s243, %s245
      %p249 = scmp.eq.s32.totalorder %s20, 0
      %p250 = por %p248, %p249
      %p251 = scmp.ne.s32.totalorder %s243, %s245
      %p252 = scmp.eq.s32.totalorder %s25, 1
      %p253 = por %p251, %p252
      %p254 = scmp.ne.s32.totalorder %s245, %s246
      %p255 = scmp.eq.s32.totalorder %s25, 0
      %p256 = por %p254, %p255
      %p257 = scmp.ne.s32.totalorder %s245, %s246
      %p258 = scmp.eq.s32.totalorder %s26, 1
      %p259 = por %p257, %p258
      %p261 = scmp.ne.s32.totalorder %s246, %s260
      %p262 = scmp.eq.s32.totalorder %s26, 0
      %p263 = por %p261, %p262
      %s264 = ssub.s32 %s20, %s27
      %p265 = scmp.eq.s32.totalorder %s264, 0
      %s267 = sadd.s32 %s266, 1
      %s268 = scalar_select %p265, %s266, %s267
      %p271 = pneg %p265
      %p272 = scmp.eq.s32.totalorder %s20, 1
      %p273 = por %p271, %p272
      %p274 = scmp.ne.s32.totalorder %s266, %s269
      %p275 = scmp.eq.s32.totalorder %s20, 0
      %p276 = por %p274, %p275
      %p277 = scmp.ne.s32.totalorder %s266, %s269
      %p278 = scmp.eq.s32.totalorder %s25, 1
      %p279 = por %p277, %p278
      %p280 = scmp.ne.s32.totalorder %s269, %s270
      %p281 = scmp.eq.s32.totalorder %s25, 0
      %p282 = por %p280, %p281
      %p283 = scmp.ne.s32.totalorder %s269, %s270
      %p284 = scmp.eq.s32.totalorder %s26, 1
      %p285 = por %p283, %p284
      %p287 = scmp.ne.s32.totalorder %s270, %s286
      %p288 = scmp.eq.s32.totalorder %s26, 0
      %p289 = por %p287, %p288
      %p290 = scmp.le.s32.totalorder 1, %s20
      %p291 = scmp.lt.s32.totalorder %s20, 3
      %p292 = pnand %p290, %p291
      %p293 = pneg %p292
      // Predicated region
      $region9: #{tpu_custom_call.1} parent=5 // pred_check
        _
      $region10: #{tpu_custom_call.1} parent=5 // pred_check_branch
        %295 = sbr.rel (%p292) target = $region12
      $region11: #{tpu_custom_call.1} parent=5 // pred_region
        %s296 = ssub.s32 %s20, 1
        // Predicated region
        $region13: #{tpu_custom_call.1} parent=11 // pred_check
          %p297 = pneg %p67
        $region14: #{tpu_custom_call.1} parent=11 // pred_check_branch
          %299 = sbr.rel (%p297) target = $region16
        $region15: #{tpu_custom_call.1} parent=11 // pred_region
          _
        $region16: #{tpu_custom_call.1} parent=11 // pred_fallthru
          _
        // Predicated region
        $region17: #{tpu_custom_call.1} parent=11 // pred_check
          %p300 = pneg %p88
        $region18: #{tpu_custom_call.1} parent=11 // pred_check_branch
          %302 = sbr.rel (%p300) target = $region20
        $region19: #{tpu_custom_call.1} parent=11 // pred_region
          _
        $region20: #{tpu_custom_call.1} parent=11 // pred_fallthru
          _
        // Predicated region
        $region21: #{tpu_custom_call.1} parent=11 // pred_check
          %p303 = pneg %p109
        $region22: #{tpu_custom_call.1} parent=11 // pred_check_branch
          %305 = sbr.rel (%p303) target = $region24
        $region23: #{tpu_custom_call.1} parent=11 // pred_region
          _
        $region24: #{tpu_custom_call.1} parent=11 // pred_fallthru
          _
        // Predicated region
        $region25: #{tpu_custom_call.1} parent=11 // pred_check
          %p306 = pneg %p130
        $region26: #{tpu_custom_call.1} parent=11 // pred_check_branch
          %308 = sbr.rel (%p306) target = $region28
        $region27: #{tpu_custom_call.1} parent=11 // pred_region
          _
        $region28: #{tpu_custom_call.1} parent=11 // pred_fallthru
          _
        // Predicated region
        $region29: #{tpu_custom_call.1} parent=11 // pred_check
          %p309 = pneg %p151
        $region30: #{tpu_custom_call.1} parent=11 // pred_check_branch
          %311 = sbr.rel (%p309) target = $region32
        $region31: #{tpu_custom_call.1} parent=11 // pred_region
          _
        $region32: #{tpu_custom_call.1} parent=11 // pred_fallthru
          _
        // Predicated region
        $region33: #{tpu_custom_call.1} parent=11 // pred_check
          %p312 = pneg %p172
        $region34: #{tpu_custom_call.1} parent=11 // pred_check_branch
          %314 = sbr.rel (%p312) target = $region36
        $region35: #{tpu_custom_call.1} parent=11 // pred_region
          _
        $region36: #{tpu_custom_call.1} parent=11 // pred_fallthru
          _
        // Predicated region
        $region37: #{tpu_custom_call.1} parent=11 // pred_check
          %p315 = pneg %p193
        $region38: #{tpu_custom_call.1} parent=11 // pred_check_branch
          %317 = sbr.rel (%p315) target = $region40
        $region39: #{tpu_custom_call.1} parent=11 // pred_region
          _
        $region40: #{tpu_custom_call.1} parent=11 // pred_fallthru
          _
        // Predicated region
        $region41: #{tpu_custom_call.1} parent=11 // pred_check
          %p318 = pneg %p214
        $region42: #{tpu_custom_call.1} parent=11 // pred_check_branch
          %320 = sbr.rel (%p318) target = $region44
        $region43: #{tpu_custom_call.1} parent=11 // pred_region
          _
        $region44: #{tpu_custom_call.1} parent=11 // pred_fallthru
          _
        // Predicated region
        $region45: #{tpu_custom_call.1} parent=11 // pred_check
          %p321 = pneg %p235
        $region46: #{tpu_custom_call.1} parent=11 // pred_check_branch
          %323 = sbr.rel (%p321) target = $region48
        $region47: #{tpu_custom_call.1} parent=11 // pred_region
          _
        $region48: #{tpu_custom_call.1} parent=11 // pred_fallthru
          _
        // Predicated region
        $region49: #{tpu_custom_call.1} parent=11 // pred_check
          %p324 = pneg %p256
        $region50: #{tpu_custom_call.1} parent=11 // pred_check_branch
          %326 = sbr.rel (%p324) target = $region52
        $region51: #{tpu_custom_call.1} parent=11 // pred_region
          _
        $region52: #{tpu_custom_call.1} parent=11 // pred_fallthru
          _
      $region12: #{tpu_custom_call.1} parent=5 // pred_fallthru
        _
      %p327 = scmp.lt.s32.totalorder %s20, 2
      // Predicated region
      $region53: #{tpu_custom_call.1} parent=5 // pred_check
        %p328 = pneg %p327
      $region54: #{tpu_custom_call.1} parent=5 // pred_check_branch
        %330 = sbr.rel (%p328) target = $region56
      $region55: #{tpu_custom_call.1} parent=5 // pred_region
        // Predicated region
        $region57: #{tpu_custom_call.1} parent=55 // pred_check
          %p331 = pneg %p40
        $region58: #{tpu_custom_call.1} parent=55 // pred_check_branch
          %333 = sbr.rel (%p331) target = $region60
        $region59: #{tpu_custom_call.1} parent=55 // pred_region
          %p334 = scmp.lt.s32.totalorder %s20, 1
          %s335 = scalar_select %p334, %s20, 1
          %s336 = smul.addr %s335, 4
          %s337 = scalar_lea.vmem %s0, %s336
        $region60: #{tpu_custom_call.1} parent=55 // pred_fallthru
          _
      $region56: #{tpu_custom_call.1} parent=5 // pred_fallthru
        _
      %p338 = scmp.le.s32.totalorder 1, %s20
      %p339 = scmp.lt.s32.totalorder %s20, 3
      %p340 = pnand %p338, %p339
      %p341 = pneg %p340
      // Predicated region
      $region61: #{tpu_custom_call.1} parent=5 // pred_check
        _
      $region62: #{tpu_custom_call.1} parent=5 // pred_check_branch
        %343 = sbr.rel (%p340) target = $region64
      $region63: #{tpu_custom_call.1} parent=5 // pred_region
        %s344 = ssub.s32 %s20, 1
        %p345 = scmp.lt.s32.totalorder %s25, 1
        %s346 = scalar_select %p345, %s25, 1
        %s347 = smul.addr %s346, 4
        %s348 = scalar_lea.vmem %s0, %s347
        %p349 = pneg %p46
        %p350 = pneg %p43
        %p351 = pneg %p67
        %p352 = pneg %p64
        %p353 = pneg %p88
        %p354 = pneg %p85
        %p355 = pneg %p109
        %p356 = pneg %p106
        %p357 = pneg %p130
        %p358 = pneg %p127
        %p359 = pneg %p151
        %p360 = pneg %p148
        %p361 = pneg %p172
        %p362 = pneg %p169
        %p363 = pneg %p193
        %p364 = pneg %p190
        %p365 = pneg %p214
        %p366 = pneg %p211
        %p367 = pneg %p235
        %p368 = pneg %p232
        %p369 = pneg %p256
        %p370 = pneg %p253
        %p371 = pneg %p282
        %p372 = pneg %p279
        %s373 = sand.u32 %s269, 1
        %s374 = scalar_lea.sflag [#allocation3], %s373
        %s375 = sand.u32 %s269, 1
        %s376 = smul.addr %s375, 2
        %s377 = scalar_lea.vmem [#allocation2], %s376
        %p378 = scmp.lt.s32.totalorder %s25, 1
        %s379 = scalar_select %p378, %s25, 1
        %s380 = smul.addr %s379, 4
        %s381 = scalar_lea.vmem %s0, %s380
        %v382 = vld [vmem:[%s381] sm:$0x7]
        %v383 = vld [vmem:[%s1] sm:$0xff]
        %v384 = vld [vmem:[%s1 + $0x8] sm:$0xff]
        %v385 = vld [vmem:[%s1 + $0x10] sm:$0xff]
        %v386 = vld [vmem:[%s1 + $0x18] sm:$0xff]
        %v387 = vld [vmem:[%s2] sm:$0xff]
        %v388 = vld [vmem:[%s2 + $0x8] sm:$0xff]
        %v389 = vld [vmem:[%s2 + $0x10] sm:$0xff]
        %v390 = vld [vmem:[%s2 + $0x18] sm:$0xff]
        %392 = vset.pattern.permute.xlu0 0
        %393 = vperm.xlu0 %392, %v387
        %v394 = vpop.permute.xlu0 %393
        %397 = vset.pattern.permute.xlu0 0
        %398 = vperm.xlu0 %397, %v388
        %v399 = vpop.permute.xlu0 %398
        %402 = vset.pattern.permute.xlu0 0
        %403 = vperm.xlu0 %402, %v389
        %v404 = vpop.permute.xlu0 %403
        %407 = vset.pattern.permute.xlu0 0
        %408 = vperm.xlu0 %407, %v390
        %v409 = vpop.permute.xlu0 %408
        %vm411 = vcmask 23552
        %v413 = vsel %vm411, %v383, 0
        %v416 = vsel %vm411, %v384, 0
        %v419 = vsel %vm411, %v385, 0
        %v422 = vsel %vm411, %v386, 0
        %vm424 = vcmask 1042432
        %v426 = vsel %vm424, %v382, 0
        %428 = vmatprep.subr.mxu0 0.0
        %429 = vmatpush1.msra.mxu0 0.0
        %430 = vmatprep.subr.mxu0 0.0
        %431 = vmatpush1.msra.mxu0 0.0
        %432 = vmatprep.subr.mxu0 0.0
        %433 = vmatpush1.msra.mxu0 0.0
        %434 = vmatprep.subr.mxu0 0.0
        %435 = vmatpush1.msra.mxu0 0.0
        %436 = vmatprep.subr.mxu0 0.0
        %437 = vmatpush1.msra.mxu0 0.0
        %438 = vmatprep.subr.mxu0 0.0
        %439 = vmatpush1.msra.mxu0 0.0
        %440 = vmatprep.subr.mxu0 0.0
        %441 = vmatpush1.msra.mxu0 0.0
        %442 = vmatprep.subr.mxu0 0.0
        %443 = vmatpush1.msra.mxu0 0.0
        %444 = vmatprep.subr.mxu0 0.0
        %445 = vmatpush1.msra.mxu0 0.0
        %446 = vmatprep.subr.mxu0 0.0
        %447 = vmatpush1.msra.mxu0 0.0
        %448 = vmatprep.subr.mxu0 0.0
        %449 = vmatpush1.msra.mxu0 0.0
        %450 = vmatprep.subr.mxu0 0.0
        %451 = vmatpush1.msra.mxu0 0.0
        %452 = vmatprep.subr.mxu0 0.0
        %453 = vmatpush1.msra.mxu0 0.0
        %454 = vmatprep.subr.mxu0 0.0
        %455 = vmatpush1.msra.mxu0 0.0
        %456 = vmatprep.subr.mxu0 0.0
        %457 = vmatpush1.msra.mxu0 0.0
        %458 = vmatprep.subr.mxu0 0.0
        %459 = vmatpush1.msra.mxu0 %v426
        %460 = vmatprep.subr.mxu0 0.0
        %461 = vmatpush2.msra.mxu0 0.0
        %462 = vmatprep.subr.mxu0 0.0
        %463 = vmatpush2.msra.mxu0 0.0
        %464 = vmatprep.subr.mxu0 0.0
        %465 = vmatpush2.msra.mxu0 0.0
        %466 = vmatprep.subr.mxu0 0.0
        %467 = vmatpush2.msra.mxu0 0.0
        %468 = vmatprep.subr.mxu0 0.0
        %469 = vmatpush2.msra.mxu0 0.0
        %470 = vmatprep.subr.mxu0 0.0
        %471 = vmatpush2.msra.mxu0 0.0
        %472 = vmatprep.subr.mxu0 0.0
        %473 = vmatpush2.msra.mxu0 0.0
        %474 = vmatprep.subr.mxu0 0.0
        %475 = vmatpush2.msra.mxu0 0.0
        %476 = vmatprep.subr.mxu0 0.0
        %477 = vmatpush2.msra.mxu0 0.0
        %478 = vmatprep.subr.mxu0 0.0
        %479 = vmatpush2.msra.mxu0 0.0
        %480 = vmatprep.subr.mxu0 0.0
        %481 = vmatpush2.msra.mxu0 0.0
        %482 = vmatprep.subr.mxu0 0.0
        %483 = vmatpush2.msra.mxu0 0.0
        %484 = vmatprep.subr.mxu0 0.0
        %485 = vmatpush2.msra.mxu0 0.0
        %486 = vmatprep.subr.mxu0 0.0
        %487 = vmatpush2.msra.mxu0 0.0
        %488 = vmatprep.subr.mxu0 0.0
        %489 = vmatpush2.msra.mxu0 0.0
        %490 = vmatprep.subr.mxu0 0.0
        %491 = vmatpush2.msra.mxu0 0.0
        %492 = vmatprep.mubr.f32.mxu0 0.0
        %493 = vmatmul.mubr.f32.gmra.mxu0 %v413
        %v494 = vpop.f32.mrf.mxu0
        %v495 = vadd.f32 %v394, %v494
        %v496 = vpop.f32.mrf.mxu0
        %497 = vmatprep.mubr.f32.mxu0 0.0
        %498 = vmatmul.mubr.f32.gmra.mxu0 %v416
        %v499 = vpop.f32.mrf.mxu0
        %v500 = vadd.f32 %v399, %v499
        %v501 = vpop.f32.mrf.mxu0
        %502 = vmatprep.mubr.f32.mxu0 0.0
        %503 = vmatmul.mubr.f32.gmra.mxu0 %v419
        %v504 = vpop.f32.mrf.mxu0
        %v505 = vadd.f32 %v404, %v504
        %v506 = vpop.f32.mrf.mxu0
        %507 = vmatprep.mubr.f32.mxu0 0.0
        %508 = vmatmul.mubr.f32.gmra.mxu0 %v422
        %v509 = vpop.f32.mrf.mxu0
        %v510 = vadd.f32 %v409, %v509
        %v511 = vpop.f32.mrf.mxu0
        %512 = vdwg.mxu0
        %v513 = vand.u32 2147483647, %v495
        %vm514 = vcmp.le.f32.partialorder %v513, 0.7853982
        %vm515 = vcmp.lt.s32.totalorder %v495, 0
        %v516 = vand.u32 %v495, 2139095040
        %v517 = vshrl.u32 %v516, 23
        %v518 = vsub.s32 %v517, 127
        %v519 = vand.u32 2147483647, %v495
        %v520 = vand.u32 %v519, 8388607
        %v521 = vor.u32 %v520, 8388608
        %v522 = vsub.s32 0, %v521
        %v523 = vadd.s32 %v518, 1
        %vm524 = vcmp.gt.s32.totalorder %v523, 0
        %v525 = vsel %vm524, %v523, 0
        %v526 = vshrl.u32 %v525, 5
        %v527 = vand.u32 %v525, 31
        %v528 = vsub.s32 32, %v527
        %v529 = vshrl.u32 683565275, %v528
        %v530 = vshll.u32 683565275, %v527
        %v531 = vshrl.u32 2475754826, %v528
        %v532 = vor.u32 %v530, %v531
        %v533 = vshll.u32 2475754826, %v527
        %v534 = vshrl.u32 2131351028, %v528
        %v535 = vor.u32 %v533, %v534
        %v536 = vshll.u32 2131351028, %v527
        %v537 = vshrl.u32 2102212464, %v528
        %v538 = vor.u32 %v536, %v537
        %v539 = vshll.u32 2102212464, %v527
        %v540 = vshrl.u32 920167782, %v528
        %v541 = vor.u32 %v539, %v540
        %v542 = vshll.u32 920167782, %v527
        %v543 = vshrl.u32 1326507024, %v528
        %v544 = vor.u32 %v542, %v543
        %vm545 = vcmp.lt.s32.totalorder %v526, 1
        %vm546 = vcmp.lt.s32.totalorder %v526, 2
        %vm547 = vcmp.lt.s32.totalorder %v526, 3
        %vm548 = vcmp.lt.s32.totalorder %v526, 4
        %v549 = vsel %vm545, %v529, %v532
        %v550 = vsel %vm548, %v538, 2102212464
        %v551 = vsel %vm547, %v535, %v550
        %v552 = vsel %vm546, %v549, %v551
        %v553 = vsel %vm545, %v532, %v535
        %v554 = vsel %vm548, %v541, 920167782
        %v555 = vsel %vm547, %v538, %v554
        %v556 = vsel %vm546, %v553, %v555
        %v557 = vsel %vm545, %v535, %v538
        %v558 = vsel %vm548, %v544, 1326507024
        %v559 = vsel %vm547, %v541, %v558
        %v560 = vsel %vm546, %v557, %v559
        %v561 = vshll.u32 %v521, 8
        %v562 = vmul.u32.u64.compose %v561, %v560
        %v563 = vextract.low.u32 %v562
        %v564 = vextract.high.u32 %v562
        %v565 = vmul.u32.u64.compose %v561, %v556
        %v566 = vextract.low.u32 %v565
        %v567 = vextract.high.u32 %v565
        %v568 = vmul.u32 %v561, %v552
        %v569 = vadd.s32 %v564, %v566
        %vm570 = vc.u32 %v564, %v566
        %v571 = vadd.s32 %v567, 1
        %v572 = vsel %vm570, %v571, %v567
        %v573 = vadd.s32 %v568, %v572
        %v574 = vadd.s32 %v573, 536870912
        %v575 = vshrl.u32 %v574, 30
        %v576 = vshll.u32 %v575, 30
        %v577 = vsub.s32 %v573, %v576
        %vm578 = vcmp.lt.s32.totalorder %v577, 0
        %v579 = vsub.s32 0, %v577
        %v580 = vsel %vm578, %v579, %v577
        %v581 = vclz %v580
        %v582 = vsub.s32 %v581, 2
        %vm583 = vcmp.gt.s32.totalorder 0, %v582
        %v584 = vsel %vm583, 0, %v582
        %v585 = vsub.s32 32, %v584
        %v586 = vshll.u32 %v577, %v584
        %v587 = vshrl.u32 %v569, %v585
        %v588 = vor.u32 %v586, %v587
        %v589 = vsub.s32 4294967266, %v584
        %v590 = vadd.s32 %v589, 127
        %v591 = vshll.u32 %v590, 23
        %v592 = vor.u32 4788187, %v591
        %v593 = vand.u32 2147483647, %v592
        %v595 = vcvt.s32.f32 %v588
        %v596 = vmul.f32 %v595, %v593
        %v597 = vxor.u32 %v596, 2147483648
        %v598 = vsel %vm515, %v597, %v596
        %v599 = vsub.s32 4, %v575
        %v600 = vsel %vm515, %v599, %v575
        %v601 = vsel %vm514, %v495, %v598
        %v602 = vsel %vm514, 0, %v600
        %v603 = vcosq.f32.pop %v601
        %v604 = vsinq.f32.pop %v601
        %vm605 = vweird.f32 %v495
        %v606 = vadd.s32 %v602, 3
        %v607 = vand.u32 %v606, 3
        %vm608 = vcmp.lt.s32.totalorder %v607, 2
        %vm609 = vcmp.eq.s32.totalorder %v607, 0
        %v610 = vxor.u32 %v604, 2147483648
        %v611 = vsel %vm609, %v603, %v610
        %vm612 = vcmp.eq.s32.totalorder %v607, 2
        %v613 = vxor.u32 %v603, 2147483648
        %v614 = vsel %vm612, %v613, %v604
        %v615 = vsel %vm608, %v611, %v614
        %v616 = vsel %vm605, nan, %v615
        %v617 = vand.u32 2147483647, %v500
        %vm618 = vcmp.le.f32.partialorder %v617, 0.7853982
        %vm619 = vcmp.lt.s32.totalorder %v500, 0
        %v620 = vand.u32 %v500, 2139095040
        %v621 = vshrl.u32 %v620, 23
        %v622 = vsub.s32 %v621, 127
        %v623 = vand.u32 2147483647, %v500
        %v624 = vand.u32 %v623, 8388607
        %v625 = vor.u32 %v624, 8388608
        %v626 = vsub.s32 0, %v625
        %v627 = vadd.s32 %v622, 1
        %vm628 = vcmp.gt.s32.totalorder %v627, 0
        %v629 = vsel %vm628, %v627, 0
        %v630 = vshrl.u32 %v629, 5
        %v631 = vand.u32 %v629, 31
        %v632 = vsub.s32 32, %v631
        %v633 = vshrl.u32 683565275, %v632
        %v634 = vshll.u32 683565275, %v631
        %v635 = vshrl.u32 2475754826, %v632
        %v636 = vor.u32 %v634, %v635
        %v637 = vshll.u32 2475754826, %v631
        %v638 = vshrl.u32 2131351028, %v632
        %v639 = vor.u32 %v637, %v638
        %v640 = vshll.u32 2131351028, %v631
        %v641 = vshrl.u32 2102212464, %v632
        %v642 = vor.u32 %v640, %v641
        %v643 = vshll.u32 2102212464, %v631
        %v644 = vshrl.u32 920167782, %v632
        %v645 = vor.u32 %v643, %v644
        %v646 = vshll.u32 920167782, %v631
        %v647 = vshrl.u32 1326507024, %v632
        %v648 = vor.u32 %v646, %v647
        %vm649 = vcmp.lt.s32.totalorder %v630, 1
        %vm650 = vcmp.lt.s32.totalorder %v630, 2
        %vm651 = vcmp.lt.s32.totalorder %v630, 3
        %vm652 = vcmp.lt.s32.totalorder %v630, 4
        %v653 = vsel %vm649, %v633, %v636
        %v654 = vsel %vm652, %v642, 2102212464
        %v655 = vsel %vm651, %v639, %v654
        %v656 = vsel %vm650, %v653, %v655
        %v657 = vsel %vm649, %v636, %v639
        %v658 = vsel %vm652, %v645, 920167782
        %v659 = vsel %vm651, %v642, %v658
        %v660 = vsel %vm650, %v657, %v659
        %v661 = vsel %vm649, %v639, %v642
        %v662 = vsel %vm652, %v648, 1326507024
        %v663 = vsel %vm651, %v645, %v662
        %v664 = vsel %vm650, %v661, %v663
        %v665 = vshll.u32 %v625, 8
        %v666 = vmul.u32.u64.compose %v665, %v664
        %v667 = vextract.low.u32 %v666
        %v668 = vextract.high.u32 %v666
        %v669 = vmul.u32.u64.compose %v665, %v660
        %v670 = vextract.low.u32 %v669
        %v671 = vextract.high.u32 %v669
        %v672 = vmul.u32 %v665, %v656
        %v673 = vadd.s32 %v668, %v670
        %vm674 = vc.u32 %v668, %v670
        %v675 = vadd.s32 %v671, 1
        %v676 = vsel %vm674, %v675, %v671
        %v677 = vadd.s32 %v672, %v676
        %v678 = vadd.s32 %v677, 536870912
        %v679 = vshrl.u32 %v678, 30
        %v680 = vshll.u32 %v679, 30
        %v681 = vsub.s32 %v677, %v680
        %vm682 = vcmp.lt.s32.totalorder %v681, 0
        %v683 = vsub.s32 0, %v681
        %v684 = vsel %vm682, %v683, %v681
        %v685 = vclz %v684
        %v686 = vsub.s32 %v685, 2
        %vm687 = vcmp.gt.s32.totalorder 0, %v686
        %v688 = vsel %vm687, 0, %v686
        %v689 = vsub.s32 32, %v688
        %v690 = vshll.u32 %v681, %v688
        %v691 = vshrl.u32 %v673, %v689
        %v692 = vor.u32 %v690, %v691
        %v693 = vsub.s32 4294967266, %v688
        %v694 = vadd.s32 %v693, 127
        %v695 = vshll.u32 %v694, 23
        %v696 = vor.u32 4788187, %v695
        %v697 = vand.u32 2147483647, %v696
        %v699 = vcvt.s32.f32 %v692
        %v700 = vmul.f32 %v699, %v697
        %v701 = vxor.u32 %v700, 2147483648
        %v702 = vsel %vm619, %v701, %v700
        %v703 = vsub.s32 4, %v679
        %v704 = vsel %vm619, %v703, %v679
        %v705 = vsel %vm618, %v500, %v702
        %v706 = vsel %vm618, 0, %v704
        %v707 = vcosq.f32.pop %v705
        %v708 = vsinq.f32.pop %v705
        %vm709 = vweird.f32 %v500
        %v710 = vadd.s32 %v706, 3
        %v711 = vand.u32 %v710, 3
        %vm712 = vcmp.lt.s32.totalorder %v711, 2
        %vm713 = vcmp.eq.s32.totalorder %v711, 0
        %v714 = vxor.u32 %v708, 2147483648
        %v715 = vsel %vm713, %v707, %v714
        %vm716 = vcmp.eq.s32.totalorder %v711, 2
        %v717 = vxor.u32 %v707, 2147483648
        %v718 = vsel %vm716, %v717, %v708
        %v719 = vsel %vm712, %v715, %v718
        %v720 = vsel %vm709, nan, %v719
        %v721 = vand.u32 2147483647, %v505
        %vm722 = vcmp.le.f32.partialorder %v721, 0.7853982
        %vm723 = vcmp.lt.s32.totalorder %v505, 0
        %v724 = vand.u32 %v505, 2139095040
        %v725 = vshrl.u32 %v724, 23
        %v726 = vsub.s32 %v725, 127
        %v727 = vand.u32 2147483647, %v505
        %v728 = vand.u32 %v727, 8388607
        %v729 = vor.u32 %v728, 8388608
        %v730 = vsub.s32 0, %v729
        %v731 = vadd.s32 %v726, 1
        %vm732 = vcmp.gt.s32.totalorder %v731, 0
        %v733 = vsel %vm732, %v731, 0
        %v734 = vshrl.u32 %v733, 5
        %v735 = vand.u32 %v733, 31
        %v736 = vsub.s32 32, %v735
        %v737 = vshrl.u32 683565275, %v736
        %v738 = vshll.u32 683565275, %v735
        %v739 = vshrl.u32 2475754826, %v736
        %v740 = vor.u32 %v738, %v739
        %v741 = vshll.u32 2475754826, %v735
        %v742 = vshrl.u32 2131351028, %v736
        %v743 = vor.u32 %v741, %v742
        %v744 = vshll.u32 2131351028, %v735
        %v745 = vshrl.u32 2102212464, %v736
        %v746 = vor.u32 %v744, %v745
        %v747 = vshll.u32 2102212464, %v735
        %v748 = vshrl.u32 920167782, %v736
        %v749 = vor.u32 %v747, %v748
        %v750 = vshll.u32 920167782, %v735
        %v751 = vshrl.u32 1326507024, %v736
        %v752 = vor.u32 %v750, %v751
        %vm753 = vcmp.lt.s32.totalorder %v734, 1
        %vm754 = vcmp.lt.s32.totalorder %v734, 2
        %vm755 = vcmp.lt.s32.totalorder %v734, 3
        %vm756 = vcmp.lt.s32.totalorder %v734, 4
        %v757 = vsel %vm753, %v737, %v740
        %v758 = vsel %vm756, %v746, 2102212464
        %v759 = vsel %vm755, %v743, %v758
        %v760 = vsel %vm754, %v757, %v759
        %v761 = vsel %vm753, %v740, %v743
        %v762 = vsel %vm756, %v749, 920167782
        %v763 = vsel %vm755, %v746, %v762
        %v764 = vsel %vm754, %v761, %v763
        %v765 = vsel %vm753, %v743, %v746
        %v766 = vsel %vm756, %v752, 1326507024
        %v767 = vsel %vm755, %v749, %v766
        %v768 = vsel %vm754, %v765, %v767
        %v769 = vshll.u32 %v729, 8
        %v770 = vmul.u32.u64.compose %v769, %v768
        %v771 = vextract.low.u32 %v770
        %v772 = vextract.high.u32 %v770
        %v773 = vmul.u32.u64.compose %v769, %v764
        %v774 = vextract.low.u32 %v773
        %v775 = vextract.high.u32 %v773
        %v776 = vmul.u32 %v769, %v760
        %v777 = vadd.s32 %v772, %v774
        %vm778 = vc.u32 %v772, %v774
        %v779 = vadd.s32 %v775, 1
        %v780 = vsel %vm778, %v779, %v775
        %v781 = vadd.s32 %v776, %v780
        %v782 = vadd.s32 %v781, 536870912
        %v783 = vshrl.u32 %v782, 30
        %v784 = vshll.u32 %v783, 30
        %v785 = vsub.s32 %v781, %v784
        %vm786 = vcmp.lt.s32.totalorder %v785, 0
        %v787 = vsub.s32 0, %v785
        %v788 = vsel %vm786, %v787, %v785
        %v789 = vclz %v788
        %v790 = vsub.s32 %v789, 2
        %vm791 = vcmp.gt.s32.totalorder 0, %v790
        %v792 = vsel %vm791, 0, %v790
        %v793 = vsub.s32 32, %v792
        %v794 = vshll.u32 %v785, %v792
        %v795 = vshrl.u32 %v777, %v793
        %v796 = vor.u32 %v794, %v795
        %v797 = vsub.s32 4294967266, %v792
        %v798 = vadd.s32 %v797, 127
        %v799 = vshll.u32 %v798, 23
        %v800 = vor.u32 4788187, %v799
        %v801 = vand.u32 2147483647, %v800
        %v803 = vcvt.s32.f32 %v796
        %v804 = vmul.f32 %v803, %v801
        %v805 = vxor.u32 %v804, 2147483648
        %v806 = vsel %vm723, %v805, %v804
        %v807 = vsub.s32 4, %v783
        %v808 = vsel %vm723, %v807, %v783
        %v809 = vsel %vm722, %v505, %v806
        %v810 = vsel %vm722, 0, %v808
        %v811 = vcosq.f32.pop %v809
        %v812 = vsinq.f32.pop %v809
        %vm813 = vweird.f32 %v505
        %v814 = vadd.s32 %v810, 3
        %v815 = vand.u32 %v814, 3
        %vm816 = vcmp.lt.s32.totalorder %v815, 2
        %vm817 = vcmp.eq.s32.totalorder %v815, 0
        %v818 = vxor.u32 %v812, 2147483648
        %v819 = vsel %vm817, %v811, %v818
        %vm820 = vcmp.eq.s32.totalorder %v815, 2
        %v821 = vxor.u32 %v811, 2147483648
        %v822 = vsel %vm820, %v821, %v812
        %v823 = vsel %vm816, %v819, %v822
        %v824 = vsel %vm813, nan, %v823
        %v825 = vand.u32 2147483647, %v510
        %vm826 = vcmp.le.f32.partialorder %v825, 0.7853982
        %vm827 = vcmp.lt.s32.totalorder %v510, 0
        %v828 = vand.u32 %v510, 2139095040
        %v829 = vshrl.u32 %v828, 23
        %v830 = vsub.s32 %v829, 127
        %v831 = vand.u32 2147483647, %v510
        %v832 = vand.u32 %v831, 8388607
        %v833 = vor.u32 %v832, 8388608
        %v834 = vsub.s32 0, %v833
        %v835 = vadd.s32 %v830, 1
        %vm836 = vcmp.gt.s32.totalorder %v835, 0
        %v837 = vsel %vm836, %v835, 0
        %v838 = vshrl.u32 %v837, 5
        %v839 = vand.u32 %v837, 31
        %v840 = vsub.s32 32, %v839
        %v841 = vshrl.u32 683565275, %v840
        %v842 = vshll.u32 683565275, %v839
        %v843 = vshrl.u32 2475754826, %v840
        %v844 = vor.u32 %v842, %v843
        %v845 = vshll.u32 2475754826, %v839
        %v846 = vshrl.u32 2131351028, %v840
        %v847 = vor.u32 %v845, %v846
        %v848 = vshll.u32 2131351028, %v839
        %v849 = vshrl.u32 2102212464, %v840
        %v850 = vor.u32 %v848, %v849
        %v851 = vshll.u32 2102212464, %v839
        %v852 = vshrl.u32 920167782, %v840
        %v853 = vor.u32 %v851, %v852
        %v854 = vshll.u32 920167782, %v839
        %v855 = vshrl.u32 1326507024, %v840
        %v856 = vor.u32 %v854, %v855
        %vm857 = vcmp.lt.s32.totalorder %v838, 1
        %vm858 = vcmp.lt.s32.totalorder %v838, 2
        %vm859 = vcmp.lt.s32.totalorder %v838, 3
        %vm860 = vcmp.lt.s32.totalorder %v838, 4
        %v861 = vsel %vm857, %v841, %v844
        %v862 = vsel %vm860, %v850, 2102212464
        %v863 = vsel %vm859, %v847, %v862
        %v864 = vsel %vm858, %v861, %v863
        %v865 = vsel %vm857, %v844, %v847
        %v866 = vsel %vm860, %v853, 920167782
        %v867 = vsel %vm859, %v850, %v866
        %v868 = vsel %vm858, %v865, %v867
        %v869 = vsel %vm857, %v847, %v850
        %v870 = vsel %vm860, %v856, 1326507024
        %v871 = vsel %vm859, %v853, %v870
        %v872 = vsel %vm858, %v869, %v871
        %v873 = vshll.u32 %v833, 8
        %v874 = vmul.u32.u64.compose %v873, %v872
        %v875 = vextract.low.u32 %v874
        %v876 = vextract.high.u32 %v874
        %v877 = vmul.u32.u64.compose %v873, %v868
        %v878 = vextract.low.u32 %v877
        %v879 = vextract.high.u32 %v877
        %v880 = vmul.u32 %v873, %v864
        %v881 = vadd.s32 %v876, %v878
        %vm882 = vc.u32 %v876, %v878
        %v883 = vadd.s32 %v879, 1
        %v884 = vsel %vm882, %v883, %v879
        %v885 = vadd.s32 %v880, %v884
        %v886 = vadd.s32 %v885, 536870912
        %v887 = vshrl.u32 %v886, 30
        %v888 = vshll.u32 %v887, 30
        %v889 = vsub.s32 %v885, %v888
        %vm890 = vcmp.lt.s32.totalorder %v889, 0
        %v891 = vsub.s32 0, %v889
        %v892 = vsel %vm890, %v891, %v889
        %v893 = vclz %v892
        %v894 = vsub.s32 %v893, 2
        %vm895 = vcmp.gt.s32.totalorder 0, %v894
        %v896 = vsel %vm895, 0, %v894
        %v897 = vsub.s32 32, %v896
        %v898 = vshll.u32 %v889, %v896
        %v899 = vshrl.u32 %v881, %v897
        %v900 = vor.u32 %v898, %v899
        %v901 = vsub.s32 4294967266, %v896
        %v902 = vadd.s32 %v901, 127
        %v903 = vshll.u32 %v902, 23
        %v904 = vor.u32 4788187, %v903
        %v905 = vand.u32 2147483647, %v904
        %v907 = vcvt.s32.f32 %v900
        %v908 = vmul.f32 %v907, %v905
        %v909 = vxor.u32 %v908, 2147483648
        %v910 = vsel %vm827, %v909, %v908
        %v911 = vsub.s32 4, %v887
        %v912 = vsel %vm827, %v911, %v887
        %v913 = vsel %vm826, %v510, %v910
        %v914 = vsel %vm826, 0, %v912
        %v915 = vcosq.f32.pop %v913
        %v916 = vsinq.f32.pop %v913
        %vm917 = vweird.f32 %v510
        %v918 = vadd.s32 %v914, 3
        %v919 = vand.u32 %v918, 3
        %vm920 = vcmp.lt.s32.totalorder %v919, 2
        %vm921 = vcmp.eq.s32.totalorder %v919, 0
        %v922 = vxor.u32 %v916, 2147483648
        %v923 = vsel %vm921, %v915, %v922
        %vm924 = vcmp.eq.s32.totalorder %v919, 2
        %v925 = vxor.u32 %v915, 2147483648
        %v926 = vsel %vm924, %v925, %v916
        %v927 = vsel %vm920, %v923, %v926
        %v928 = vsel %vm917, nan, %v927
        %v929 = vld [vmem:[%s3] sm:$0xff]
        %v930 = vld [vmem:[%s3 + $0x8] sm:$0xff]
        %v931 = vld [vmem:[%s3 + $0x10] sm:$0xff]
        %v932 = vld [vmem:[%s3 + $0x18] sm:$0xff]
        %v933 = vld [vmem:[%s4] sm:$0xff]
        %v934 = vld [vmem:[%s4 + $0x8] sm:$0xff]
        %v935 = vld [vmem:[%s4 + $0x10] sm:$0xff]
        %v936 = vld [vmem:[%s4 + $0x18] sm:$0xff]
        %938 = vset.pattern.permute.xlu0 0
        %939 = vperm.xlu0 %938, %v933
        %v940 = vpop.permute.xlu0 %939
        %943 = vset.pattern.permute.xlu0 0
        %944 = vperm.xlu0 %943, %v934
        %v945 = vpop.permute.xlu0 %944
        %948 = vset.pattern.permute.xlu0 0
        %949 = vperm.xlu0 %948, %v935
        %v950 = vpop.permute.xlu0 %949
        %953 = vset.pattern.permute.xlu0 0
        %954 = vperm.xlu0 %953, %v936
        %v955 = vpop.permute.xlu0 %954
        %vm957 = vcmask 261120
        %v959 = vsel %vm957, %v929, 0
        %v962 = vsel %vm957, %v930, 0
        %v965 = vsel %vm957, %v931, 0
        %v968 = vsel %vm957, %v932, 0
        %970 = vmatprep.subr.mxu0 0.0
        %971 = vmatpush1.msra.mxu0 0.0
        %972 = vmatprep.subr.mxu0 0.0
        %973 = vmatpush1.msra.mxu0 0.0
        %974 = vmatprep.subr.mxu0 0.0
        %975 = vmatpush1.msra.mxu0 0.0
        %976 = vmatprep.subr.mxu0 0.0
        %977 = vmatpush1.msra.mxu0 0.0
        %978 = vmatprep.subr.mxu0 0.0
        %979 = vmatpush1.msra.mxu0 0.0
        %980 = vmatprep.subr.mxu0 0.0
        %981 = vmatpush1.msra.mxu0 0.0
        %982 = vmatprep.subr.mxu0 0.0
        %983 = vmatpush1.msra.mxu0 0.0
        %984 = vmatprep.subr.mxu0 0.0
        %985 = vmatpush1.msra.mxu0 0.0
        %986 = vmatprep.subr.mxu0 0.0
        %987 = vmatpush1.msra.mxu0 0.0
        %988 = vmatprep.subr.mxu0 0.0
        %989 = vmatpush1.msra.mxu0 0.0
        %990 = vmatprep.subr.mxu0 0.0
        %991 = vmatpush1.msra.mxu0 0.0
        %992 = vmatprep.subr.mxu0 0.0
        %993 = vmatpush1.msra.mxu0 0.0
        %994 = vmatprep.subr.mxu0 0.0
        %995 = vmatpush1.msra.mxu0 %v928
        %996 = vmatprep.subr.mxu0 0.0
        %997 = vmatpush1.msra.mxu0 %v824
        %998 = vmatprep.subr.mxu0 0.0
        %999 = vmatpush1.msra.mxu0 %v720
        %1000 = vmatprep.subr.mxu0 0.0
        %1001 = vmatpush1.msra.mxu0 %v616
        %1002 = vmatprep.subr.mxu0 0.0
        %1003 = vmatpush2.msra.mxu0 0.0
        %1004 = vmatprep.subr.mxu0 0.0
        %1005 = vmatpush2.msra.mxu0 0.0
        %1006 = vmatprep.subr.mxu0 0.0
        %1007 = vmatpush2.msra.mxu0 0.0
        %1008 = vmatprep.subr.mxu0 0.0
        %1009 = vmatpush2.msra.mxu0 0.0
        %1010 = vmatprep.subr.mxu0 0.0
        %1011 = vmatpush2.msra.mxu0 0.0
        %1012 = vmatprep.subr.mxu0 0.0
        %1013 = vmatpush2.msra.mxu0 0.0
        %1014 = vmatprep.subr.mxu0 0.0
        %1015 = vmatpush2.msra.mxu0 0.0
        %1016 = vmatprep.subr.mxu0 0.0
        %1017 = vmatpush2.msra.mxu0 0.0
        %1018 = vmatprep.subr.mxu0 0.0
        %1019 = vmatpush2.msra.mxu0 0.0
        %1020 = vmatprep.subr.mxu0 0.0
        %1021 = vmatpush2.msra.mxu0 0.0
        %1022 = vmatprep.subr.mxu0 0.0
        %1023 = vmatpush2.msra.mxu0 0.0
        %1024 = vmatprep.subr.mxu0 0.0
        %1025 = vmatpush2.msra.mxu0 0.0
        %1026 = vmatprep.subr.mxu0 0.0
        %1027 = vmatpush2.msra.mxu0 0.0
        %1028 = vmatprep.subr.mxu0 0.0
        %1029 = vmatpush2.msra.mxu0 0.0
        %1030 = vmatprep.subr.mxu0 0.0
        %1031 = vmatpush2.msra.mxu0 0.0
        %1032 = vmatprep.subr.mxu0 0.0
        %1033 = vmatpush2.msra.mxu0 0.0
        %1034 = vmatprep.mubr.f32.mxu0 0.0
        %1035 = vmatmul.mubr.f32.gmra.mxu0 %v959
        %v1036 = vpop.f32.mrf.mxu0
        %v1037 = vadd.f32 %v940, %v1036
        %v1038 = vpop.f32.mrf.mxu0
        %1039 = vmatprep.mubr.f32.mxu0 0.0
        %1040 = vmatmul.mubr.f32.gmra.mxu0 %v962
        %v1041 = vpop.f32.mrf.mxu0
        %v1042 = vadd.f32 %v945, %v1041
        %v1043 = vpop.f32.mrf.mxu0
        %1044 = vmatprep.mubr.f32.mxu0 0.0
        %1045 = vmatmul.mubr.f32.gmra.mxu0 %v965
        %v1046 = vpop.f32.mrf.mxu0
        %v1047 = vadd.f32 %v950, %v1046
        %v1048 = vpop.f32.mrf.mxu0
        %1049 = vmatprep.mubr.f32.mxu0 0.0
        %1050 = vmatmul.mubr.f32.gmra.mxu0 %v968
        %v1051 = vpop.f32.mrf.mxu0
        %v1052 = vadd.f32 %v955, %v1051
        %v1053 = vpop.f32.mrf.mxu0
        %1054 = vdwg.mxu0
        %v1055 = vand.u32 2147483647, %v1037
        %vm1056 = vcmp.le.f32.partialorder %v1055, 0.7853982
        %vm1057 = vcmp.lt.s32.totalorder %v1037, 0
        %v1058 = vand.u32 %v1037, 2139095040
        %v1059 = vshrl.u32 %v1058, 23
        %v1060 = vsub.s32 %v1059, 127
        %v1061 = vand.u32 2147483647, %v1037
        %v1062 = vand.u32 %v1061, 8388607
        %v1063 = vor.u32 %v1062, 8388608
        %v1064 = vsub.s32 0, %v1063
        %v1065 = vadd.s32 %v1060, 1
        %vm1066 = vcmp.gt.s32.totalorder %v1065, 0
        %v1067 = vsel %vm1066, %v1065, 0
        %v1068 = vshrl.u32 %v1067, 5
        %v1069 = vand.u32 %v1067, 31
        %v1070 = vsub.s32 32, %v1069
        %v1071 = vshrl.u32 683565275, %v1070
        %v1072 = vshll.u32 683565275, %v1069
        %v1073 = vshrl.u32 2475754826, %v1070
        %v1074 = vor.u32 %v1072, %v1073
        %v1075 = vshll.u32 2475754826, %v1069
        %v1076 = vshrl.u32 2131351028, %v1070
        %v1077 = vor.u32 %v1075, %v1076
        %v1078 = vshll.u32 2131351028, %v1069
        %v1079 = vshrl.u32 2102212464, %v1070
        %v1080 = vor.u32 %v1078, %v1079
        %v1081 = vshll.u32 2102212464, %v1069
        %v1082 = vshrl.u32 920167782, %v1070
        %v1083 = vor.u32 %v1081, %v1082
        %v1084 = vshll.u32 920167782, %v1069
        %v1085 = vshrl.u32 1326507024, %v1070
        %v1086 = vor.u32 %v1084, %v1085
        %vm1087 = vcmp.lt.s32.totalorder %v1068, 1
        %vm1088 = vcmp.lt.s32.totalorder %v1068, 2
        %vm1089 = vcmp.lt.s32.totalorder %v1068, 3
        %vm1090 = vcmp.lt.s32.totalorder %v1068, 4
        %v1091 = vsel %vm1087, %v1071, %v1074
        %v1092 = vsel %vm1090, %v1080, 2102212464
        %v1093 = vsel %vm1089, %v1077, %v1092
        %v1094 = vsel %vm1088, %v1091, %v1093
        %v1095 = vsel %vm1087, %v1074, %v1077
        %v1096 = vsel %vm1090, %v1083, 920167782
        %v1097 = vsel %vm1089, %v1080, %v1096
        %v1098 = vsel %vm1088, %v1095, %v1097
        %v1099 = vsel %vm1087, %v1077, %v1080
        %v1100 = vsel %vm1090, %v1086, 1326507024
        %v1101 = vsel %vm1089, %v1083, %v1100
        %v1102 = vsel %vm1088, %v1099, %v1101
        %v1103 = vshll.u32 %v1063, 8
        %v1104 = vmul.u32.u64.compose %v1103, %v1102
        %v1105 = vextract.low.u32 %v1104
        %v1106 = vextract.high.u32 %v1104
        %v1107 = vmul.u32.u64.compose %v1103, %v1098
        %v1108 = vextract.low.u32 %v1107
        %v1109 = vextract.high.u32 %v1107
        %v1110 = vmul.u32 %v1103, %v1094
        %v1111 = vadd.s32 %v1106, %v1108
        %vm1112 = vc.u32 %v1106, %v1108
        %v1113 = vadd.s32 %v1109, 1
        %v1114 = vsel %vm1112, %v1113, %v1109
        %v1115 = vadd.s32 %v1110, %v1114
        %v1116 = vadd.s32 %v1115, 536870912
        %v1117 = vshrl.u32 %v1116, 30
        %v1118 = vshll.u32 %v1117, 30
        %v1119 = vsub.s32 %v1115, %v1118
        %vm1120 = vcmp.lt.s32.totalorder %v1119, 0
        %v1121 = vsub.s32 0, %v1119
        %v1122 = vsel %vm1120, %v1121, %v1119
        %v1123 = vclz %v1122
        %v1124 = vsub.s32 %v1123, 2
        %vm1125 = vcmp.gt.s32.totalorder 0, %v1124
        %v1126 = vsel %vm1125, 0, %v1124
        %v1127 = vsub.s32 32, %v1126
        %v1128 = vshll.u32 %v1119, %v1126
        %v1129 = vshrl.u32 %v1111, %v1127
        %v1130 = vor.u32 %v1128, %v1129
        %v1131 = vsub.s32 4294967266, %v1126
        %v1132 = vadd.s32 %v1131, 127
        %v1133 = vshll.u32 %v1132, 23
        %v1134 = vor.u32 4788187, %v1133
        %v1135 = vand.u32 2147483647, %v1134
        %v1137 = vcvt.s32.f32 %v1130
        %v1138 = vmul.f32 %v1137, %v1135
        %v1139 = vxor.u32 %v1138, 2147483648
        %v1140 = vsel %vm1057, %v1139, %v1138
        %v1141 = vsub.s32 4, %v1117
        %v1142 = vsel %vm1057, %v1141, %v1117
        %v1143 = vsel %vm1056, %v1037, %v1140
        %v1144 = vsel %vm1056, 0, %v1142
        %v1145 = vcosq.f32.pop %v1143
        %v1146 = vsinq.f32.pop %v1143
        %vm1147 = vweird.f32 %v1037
        %v1148 = vadd.s32 %v1144, 3
        %v1149 = vand.u32 %v1148, 3
        %vm1150 = vcmp.lt.s32.totalorder %v1149, 2
        %vm1151 = vcmp.eq.s32.totalorder %v1149, 0
        %v1152 = vxor.u32 %v1146, 2147483648
        %v1153 = vsel %vm1151, %v1145, %v1152
        %vm1154 = vcmp.eq.s32.totalorder %v1149, 2
        %v1155 = vxor.u32 %v1145, 2147483648
        %v1156 = vsel %vm1154, %v1155, %v1146
        %v1157 = vsel %vm1150, %v1153, %v1156
        %v1158 = vsel %vm1147, nan, %v1157
        %v1159 = vand.u32 2147483647, %v1042
        %vm1160 = vcmp.le.f32.partialorder %v1159, 0.7853982
        %vm1161 = vcmp.lt.s32.totalorder %v1042, 0
        %v1162 = vand.u32 %v1042, 2139095040
        %v1163 = vshrl.u32 %v1162, 23
        %v1164 = vsub.s32 %v1163, 127
        %v1165 = vand.u32 2147483647, %v1042
        %v1166 = vand.u32 %v1165, 8388607
        %v1167 = vor.u32 %v1166, 8388608
        %v1168 = vsub.s32 0, %v1167
        %v1169 = vadd.s32 %v1164, 1
        %vm1170 = vcmp.gt.s32.totalorder %v1169, 0
        %v1171 = vsel %vm1170, %v1169, 0
        %v1172 = vshrl.u32 %v1171, 5
        %v1173 = vand.u32 %v1171, 31
        %v1174 = vsub.s32 32, %v1173
        %v1175 = vshrl.u32 683565275, %v1174
        %v1176 = vshll.u32 683565275, %v1173
        %v1177 = vshrl.u32 2475754826, %v1174
        %v1178 = vor.u32 %v1176, %v1177
        %v1179 = vshll.u32 2475754826, %v1173
        %v1180 = vshrl.u32 2131351028, %v1174
        %v1181 = vor.u32 %v1179, %v1180
        %v1182 = vshll.u32 2131351028, %v1173
        %v1183 = vshrl.u32 2102212464, %v1174
        %v1184 = vor.u32 %v1182, %v1183
        %v1185 = vshll.u32 2102212464, %v1173
        %v1186 = vshrl.u32 920167782, %v1174
        %v1187 = vor.u32 %v1185, %v1186
        %v1188 = vshll.u32 920167782, %v1173
        %v1189 = vshrl.u32 1326507024, %v1174
        %v1190 = vor.u32 %v1188, %v1189
        %vm1191 = vcmp.lt.s32.totalorder %v1172, 1
        %vm1192 = vcmp.lt.s32.totalorder %v1172, 2
        %vm1193 = vcmp.lt.s32.totalorder %v1172, 3
        %vm1194 = vcmp.lt.s32.totalorder %v1172, 4
        %v1195 = vsel %vm1191, %v1175, %v1178
        %v1196 = vsel %vm1194, %v1184, 2102212464
        %v1197 = vsel %vm1193, %v1181, %v1196
        %v1198 = vsel %vm1192, %v1195, %v1197
        %v1199 = vsel %vm1191, %v1178, %v1181
        %v1200 = vsel %vm1194, %v1187, 920167782
        %v1201 = vsel %vm1193, %v1184, %v1200
        %v1202 = vsel %vm1192, %v1199, %v1201
        %v1203 = vsel %vm1191, %v1181, %v1184
        %v1204 = vsel %vm1194, %v1190, 1326507024
        %v1205 = vsel %vm1193, %v1187, %v1204
        %v1206 = vsel %vm1192, %v1203, %v1205
        %v1207 = vshll.u32 %v1167, 8
        %v1208 = vmul.u32.u64.compose %v1207, %v1206
        %v1209 = vextract.low.u32 %v1208
        %v1210 = vextract.high.u32 %v1208
        %v1211 = vmul.u32.u64.compose %v1207, %v1202
        %v1212 = vextract.low.u32 %v1211
        %v1213 = vextract.high.u32 %v1211
        %v1214 = vmul.u32 %v1207, %v1198
        %v1215 = vadd.s32 %v1210, %v1212
        %vm1216 = vc.u32 %v1210, %v1212
        %v1217 = vadd.s32 %v1213, 1
        %v1218 = vsel %vm1216, %v1217, %v1213
        %v1219 = vadd.s32 %v1214, %v1218
        %v1220 = vadd.s32 %v1219, 536870912
        %v1221 = vshrl.u32 %v1220, 30
        %v1222 = vshll.u32 %v1221, 30
        %v1223 = vsub.s32 %v1219, %v1222
        %vm1224 = vcmp.lt.s32.totalorder %v1223, 0
        %v1225 = vsub.s32 0, %v1223
        %v1226 = vsel %vm1224, %v1225, %v1223
        %v1227 = vclz %v1226
        %v1228 = vsub.s32 %v1227, 2
        %vm1229 = vcmp.gt.s32.totalorder 0, %v1228
        %v1230 = vsel %vm1229, 0, %v1228
        %v1231 = vsub.s32 32, %v1230
        %v1232 = vshll.u32 %v1223, %v1230
        %v1233 = vshrl.u32 %v1215, %v1231
        %v1234 = vor.u32 %v1232, %v1233
        %v1235 = vsub.s32 4294967266, %v1230
        %v1236 = vadd.s32 %v1235, 127
        %v1237 = vshll.u32 %v1236, 23
        %v1238 = vor.u32 4788187, %v1237
        %v1239 = vand.u32 2147483647, %v1238
        %v1241 = vcvt.s32.f32 %v1234
        %v1242 = vmul.f32 %v1241, %v1239
        %v1243 = vxor.u32 %v1242, 2147483648
        %v1244 = vsel %vm1161, %v1243, %v1242
        %v1245 = vsub.s32 4, %v1221
        %v1246 = vsel %vm1161, %v1245, %v1221
        %v1247 = vsel %vm1160, %v1042, %v1244
        %v1248 = vsel %vm1160, 0, %v1246
        %v1249 = vcosq.f32.pop %v1247
        %v1250 = vsinq.f32.pop %v1247
        %vm1251 = vweird.f32 %v1042
        %v1252 = vadd.s32 %v1248, 3
        %v1253 = vand.u32 %v1252, 3
        %vm1254 = vcmp.lt.s32.totalorder %v1253, 2
        %vm1255 = vcmp.eq.s32.totalorder %v1253, 0
        %v1256 = vxor.u32 %v1250, 2147483648
        %v1257 = vsel %vm1255, %v1249, %v1256
        %vm1258 = vcmp.eq.s32.totalorder %v1253, 2
        %v1259 = vxor.u32 %v1249, 2147483648
        %v1260 = vsel %vm1258, %v1259, %v1250
        %v1261 = vsel %vm1254, %v1257, %v1260
        %v1262 = vsel %vm1251, nan, %v1261
        %v1263 = vand.u32 2147483647, %v1047
        %vm1264 = vcmp.le.f32.partialorder %v1263, 0.7853982
        %vm1265 = vcmp.lt.s32.totalorder %v1047, 0
        %v1266 = vand.u32 %v1047, 2139095040
        %v1267 = vshrl.u32 %v1266, 23
        %v1268 = vsub.s32 %v1267, 127
        %v1269 = vand.u32 2147483647, %v1047
        %v1270 = vand.u32 %v1269, 8388607
        %v1271 = vor.u32 %v1270, 8388608
        %v1272 = vsub.s32 0, %v1271
        %v1273 = vadd.s32 %v1268, 1
        %vm1274 = vcmp.gt.s32.totalorder %v1273, 0
        %v1275 = vsel %vm1274, %v1273, 0
        %v1276 = vshrl.u32 %v1275, 5
        %v1277 = vand.u32 %v1275, 31
        %v1278 = vsub.s32 32, %v1277
        %v1279 = vshrl.u32 683565275, %v1278
        %v1280 = vshll.u32 683565275, %v1277
        %v1281 = vshrl.u32 2475754826, %v1278
        %v1282 = vor.u32 %v1280, %v1281
        %v1283 = vshll.u32 2475754826, %v1277
        %v1284 = vshrl.u32 2131351028, %v1278
        %v1285 = vor.u32 %v1283, %v1284
        %v1286 = vshll.u32 2131351028, %v1277
        %v1287 = vshrl.u32 2102212464, %v1278
        %v1288 = vor.u32 %v1286, %v1287
        %v1289 = vshll.u32 2102212464, %v1277
        %v1290 = vshrl.u32 920167782, %v1278
        %v1291 = vor.u32 %v1289, %v1290
        %v1292 = vshll.u32 920167782, %v1277
        %v1293 = vshrl.u32 1326507024, %v1278
        %v1294 = vor.u32 %v1292, %v1293
        %vm1295 = vcmp.lt.s32.totalorder %v1276, 1
        %vm1296 = vcmp.lt.s32.totalorder %v1276, 2
        %vm1297 = vcmp.lt.s32.totalorder %v1276, 3
        %vm1298 = vcmp.lt.s32.totalorder %v1276, 4
        %v1299 = vsel %vm1295, %v1279, %v1282
        %v1300 = vsel %vm1298, %v1288, 2102212464
        %v1301 = vsel %vm1297, %v1285, %v1300
        %v1302 = vsel %vm1296, %v1299, %v1301
        %v1303 = vsel %vm1295, %v1282, %v1285
        %v1304 = vsel %vm1298, %v1291, 920167782
        %v1305 = vsel %vm1297, %v1288, %v1304
        %v1306 = vsel %vm1296, %v1303, %v1305
        %v1307 = vsel %vm1295, %v1285, %v1288
        %v1308 = vsel %vm1298, %v1294, 1326507024
        %v1309 = vsel %vm1297, %v1291, %v1308
        %v1310 = vsel %vm1296, %v1307, %v1309
        %v1311 = vshll.u32 %v1271, 8
        %v1312 = vmul.u32.u64.compose %v1311, %v1310
        %v1313 = vextract.low.u32 %v1312
        %v1314 = vextract.high.u32 %v1312
        %v1315 = vmul.u32.u64.compose %v1311, %v1306
        %v1316 = vextract.low.u32 %v1315
        %v1317 = vextract.high.u32 %v1315
        %v1318 = vmul.u32 %v1311, %v1302
        %v1319 = vadd.s32 %v1314, %v1316
        %vm1320 = vc.u32 %v1314, %v1316
        %v1321 = vadd.s32 %v1317, 1
        %v1322 = vsel %vm1320, %v1321, %v1317
        %v1323 = vadd.s32 %v1318, %v1322
        %v1324 = vadd.s32 %v1323, 536870912
        %v1325 = vshrl.u32 %v1324, 30
        %v1326 = vshll.u32 %v1325, 30
        %v1327 = vsub.s32 %v1323, %v1326
        %vm1328 = vcmp.lt.s32.totalorder %v1327, 0
        %v1329 = vsub.s32 0, %v1327
        %v1330 = vsel %vm1328, %v1329, %v1327
        %v1331 = vclz %v1330
        %v1332 = vsub.s32 %v1331, 2
        %vm1333 = vcmp.gt.s32.totalorder 0, %v1332
        %v1334 = vsel %vm1333, 0, %v1332
        %v1335 = vsub.s32 32, %v1334
        %v1336 = vshll.u32 %v1327, %v1334
        %v1337 = vshrl.u32 %v1319, %v1335
        %v1338 = vor.u32 %v1336, %v1337
        %v1339 = vsub.s32 4294967266, %v1334
        %v1340 = vadd.s32 %v1339, 127
        %v1341 = vshll.u32 %v1340, 23
        %v1342 = vor.u32 4788187, %v1341
        %v1343 = vand.u32 2147483647, %v1342
        %v1345 = vcvt.s32.f32 %v1338
        %v1346 = vmul.f32 %v1345, %v1343
        %v1347 = vxor.u32 %v1346, 2147483648
        %v1348 = vsel %vm1265, %v1347, %v1346
        %v1349 = vsub.s32 4, %v1325
        %v1350 = vsel %vm1265, %v1349, %v1325
        %v1351 = vsel %vm1264, %v1047, %v1348
        %v1352 = vsel %vm1264, 0, %v1350
        %v1353 = vcosq.f32.pop %v1351
        %v1354 = vsinq.f32.pop %v1351
        %vm1355 = vweird.f32 %v1047
        %v1356 = vadd.s32 %v1352, 3
        %v1357 = vand.u32 %v1356, 3
        %vm1358 = vcmp.lt.s32.totalorder %v1357, 2
        %vm1359 = vcmp.eq.s32.totalorder %v1357, 0
        %v1360 = vxor.u32 %v1354, 2147483648
        %v1361 = vsel %vm1359, %v1353, %v1360
        %vm1362 = vcmp.eq.s32.totalorder %v1357, 2
        %v1363 = vxor.u32 %v1353, 2147483648
        %v1364 = vsel %vm1362, %v1363, %v1354
        %v1365 = vsel %vm1358, %v1361, %v1364
        %v1366 = vsel %vm1355, nan, %v1365
        %v1367 = vand.u32 2147483647, %v1052
        %vm1368 = vcmp.le.f32.partialorder %v1367, 0.7853982
        %vm1369 = vcmp.lt.s32.totalorder %v1052, 0
        %v1370 = vand.u32 %v1052, 2139095040
        %v1371 = vshrl.u32 %v1370, 23
        %v1372 = vsub.s32 %v1371, 127
        %v1373 = vand.u32 2147483647, %v1052
        %v1374 = vand.u32 %v1373, 8388607
        %v1375 = vor.u32 %v1374, 8388608
        %v1376 = vsub.s32 0, %v1375
        %v1377 = vadd.s32 %v1372, 1
        %vm1378 = vcmp.gt.s32.totalorder %v1377, 0
        %v1379 = vsel %vm1378, %v1377, 0
        %v1380 = vshrl.u32 %v1379, 5
        %v1381 = vand.u32 %v1379, 31
        %v1382 = vsub.s32 32, %v1381
        %v1383 = vshrl.u32 683565275, %v1382
        %v1384 = vshll.u32 683565275, %v1381
        %v1385 = vshrl.u32 2475754826, %v1382
        %v1386 = vor.u32 %v1384, %v1385
        %v1387 = vshll.u32 2475754826, %v1381
        %v1388 = vshrl.u32 2131351028, %v1382
        %v1389 = vor.u32 %v1387, %v1388
        %v1390 = vshll.u32 2131351028, %v1381
        %v1391 = vshrl.u32 2102212464, %v1382
        %v1392 = vor.u32 %v1390, %v1391
        %v1393 = vshll.u32 2102212464, %v1381
        %v1394 = vshrl.u32 920167782, %v1382
        %v1395 = vor.u32 %v1393, %v1394
        %v1396 = vshll.u32 920167782, %v1381
        %v1397 = vshrl.u32 1326507024, %v1382
        %v1398 = vor.u32 %v1396, %v1397
        %vm1399 = vcmp.lt.s32.totalorder %v1380, 1
        %vm1400 = vcmp.lt.s32.totalorder %v1380, 2
        %vm1401 = vcmp.lt.s32.totalorder %v1380, 3
        %vm1402 = vcmp.lt.s32.totalorder %v1380, 4
        %v1403 = vsel %vm1399, %v1383, %v1386
        %v1404 = vsel %vm1402, %v1392, 2102212464
        %v1405 = vsel %vm1401, %v1389, %v1404
        %v1406 = vsel %vm1400, %v1403, %v1405
        %v1407 = vsel %vm1399, %v1386, %v1389
        %v1408 = vsel %vm1402, %v1395, 920167782
        %v1409 = vsel %vm1401, %v1392, %v1408
        %v1410 = vsel %vm1400, %v1407, %v1409
        %v1411 = vsel %vm1399, %v1389, %v1392
        %v1412 = vsel %vm1402, %v1398, 1326507024
        %v1413 = vsel %vm1401, %v1395, %v1412
        %v1414 = vsel %vm1400, %v1411, %v1413
        %v1415 = vshll.u32 %v1375, 8
        %v1416 = vmul.u32.u64.compose %v1415, %v1414
        %v1417 = vextract.low.u32 %v1416
        %v1418 = vextract.high.u32 %v1416
        %v1419 = vmul.u32.u64.compose %v1415, %v1410
        %v1420 = vextract.low.u32 %v1419
        %v1421 = vextract.high.u32 %v1419
        %v1422 = vmul.u32 %v1415, %v1406
        %v1423 = vadd.s32 %v1418, %v1420
        %vm1424 = vc.u32 %v1418, %v1420
        %v1425 = vadd.s32 %v1421, 1
        %v1426 = vsel %vm1424, %v1425, %v1421
        %v1427 = vadd.s32 %v1422, %v1426
        %v1428 = vadd.s32 %v1427, 536870912
        %v1429 = vshrl.u32 %v1428, 30
        %v1430 = vshll.u32 %v1429, 30
        %v1431 = vsub.s32 %v1427, %v1430
        %vm1432 = vcmp.lt.s32.totalorder %v1431, 0
        %v1433 = vsub.s32 0, %v1431
        %v1434 = vsel %vm1432, %v1433, %v1431
        %v1435 = vclz %v1434
        %v1436 = vsub.s32 %v1435, 2
        %vm1437 = vcmp.gt.s32.totalorder 0, %v1436
        %v1438 = vsel %vm1437, 0, %v1436
        %v1439 = vsub.s32 32, %v1438
        %v1440 = vshll.u32 %v1431, %v1438
        %v1441 = vshrl.u32 %v1423, %v1439
        %v1442 = vor.u32 %v1440, %v1441
        %v1443 = vsub.s32 4294967266, %v1438
        %v1444 = vadd.s32 %v1443, 127
        %v1445 = vshll.u32 %v1444, 23
        %v1446 = vor.u32 4788187, %v1445
        %v1447 = vand.u32 2147483647, %v1446
        %v1449 = vcvt.s32.f32 %v1442
        %v1450 = vmul.f32 %v1449, %v1447
        %v1451 = vxor.u32 %v1450, 2147483648
        %v1452 = vsel %vm1369, %v1451, %v1450
        %v1453 = vsub.s32 4, %v1429
        %v1454 = vsel %vm1369, %v1453, %v1429
        %v1455 = vsel %vm1368, %v1052, %v1452
        %v1456 = vsel %vm1368, 0, %v1454
        %v1457 = vcosq.f32.pop %v1455
        %v1458 = vsinq.f32.pop %v1455
        %vm1459 = vweird.f32 %v1052
        %v1460 = vadd.s32 %v1456, 3
        %v1461 = vand.u32 %v1460, 3
        %vm1462 = vcmp.lt.s32.totalorder %v1461, 2
        %vm1463 = vcmp.eq.s32.totalorder %v1461, 0
        %v1464 = vxor.u32 %v1458, 2147483648
        %v1465 = vsel %vm1463, %v1457, %v1464
        %vm1466 = vcmp.eq.s32.totalorder %v1461, 2
        %v1467 = vxor.u32 %v1457, 2147483648
        %v1468 = vsel %vm1466, %v1467, %v1458
        %v1469 = vsel %vm1462, %v1465, %v1468
        %v1470 = vsel %vm1459, nan, %v1469
        %v1471 = vld [vmem:[%s5] sm:$0xff]
        %v1472 = vld [vmem:[%s5 + $0x8] sm:$0xff]
        %v1473 = vld [vmem:[%s5 + $0x10] sm:$0xff]
        %v1474 = vld [vmem:[%s5 + $0x18] sm:$0xff]
        %v1475 = vld [vmem:[%s6] sm:$0xff]
        %v1476 = vld [vmem:[%s6 + $0x8] sm:$0xff]
        %v1477 = vld [vmem:[%s6 + $0x10] sm:$0xff]
        %v1478 = vld [vmem:[%s6 + $0x18] sm:$0xff]
        %1480 = vset.pattern.permute.xlu0 0
        %1481 = vperm.xlu0 %1480, %v1475
        %v1482 = vpop.permute.xlu0 %1481
        %1485 = vset.pattern.permute.xlu0 0
        %1486 = vperm.xlu0 %1485, %v1476
        %v1487 = vpop.permute.xlu0 %1486
        %1490 = vset.pattern.permute.xlu0 0
        %1491 = vperm.xlu0 %1490, %v1477
        %v1492 = vpop.permute.xlu0 %1491
        %1495 = vset.pattern.permute.xlu0 0
        %1496 = vperm.xlu0 %1495, %v1478
        %v1497 = vpop.permute.xlu0 %1496
        %v1500 = vsel %vm957, %v1471, 0
        %v1503 = vsel %vm957, %v1472, 0
        %v1506 = vsel %vm957, %v1473, 0
        %v1509 = vsel %vm957, %v1474, 0
        %1511 = vmatprep.subr.mxu0 0.0
        %1512 = vmatpush1.msra.mxu0 0.0
        %1513 = vmatprep.subr.mxu0 0.0
        %1514 = vmatpush1.msra.mxu0 0.0
        %1515 = vmatprep.subr.mxu0 0.0
        %1516 = vmatpush1.msra.mxu0 0.0
        %1517 = vmatprep.subr.mxu0 0.0
        %1518 = vmatpush1.msra.mxu0 0.0
        %1519 = vmatprep.subr.mxu0 0.0
        %1520 = vmatpush1.msra.mxu0 0.0
        %1521 = vmatprep.subr.mxu0 0.0
        %1522 = vmatpush1.msra.mxu0 0.0
        %1523 = vmatprep.subr.mxu0 0.0
        %1524 = vmatpush1.msra.mxu0 0.0
        %1525 = vmatprep.subr.mxu0 0.0
        %1526 = vmatpush1.msra.mxu0 0.0
        %1527 = vmatprep.subr.mxu0 0.0
        %1528 = vmatpush1.msra.mxu0 0.0
        %1529 = vmatprep.subr.mxu0 0.0
        %1530 = vmatpush1.msra.mxu0 0.0
        %1531 = vmatprep.subr.mxu0 0.0
        %1532 = vmatpush1.msra.mxu0 0.0
        %1533 = vmatprep.subr.mxu0 0.0
        %1534 = vmatpush1.msra.mxu0 0.0
        %1535 = vmatprep.subr.mxu0 0.0
        %1536 = vmatpush1.msra.mxu0 %v1470
        %1537 = vmatprep.subr.mxu0 0.0
        %1538 = vmatpush1.msra.mxu0 %v1366
        %1539 = vmatprep.subr.mxu0 0.0
        %1540 = vmatpush1.msra.mxu0 %v1262
        %1541 = vmatprep.subr.mxu0 0.0
        %1542 = vmatpush1.msra.mxu0 %v1158
        %1543 = vmatprep.subr.mxu0 0.0
        %1544 = vmatpush2.msra.mxu0 0.0
        %1545 = vmatprep.subr.mxu0 0.0
        %1546 = vmatpush2.msra.mxu0 0.0
        %1547 = vmatprep.subr.mxu0 0.0
        %1548 = vmatpush2.msra.mxu0 0.0
        %1549 = vmatprep.subr.mxu0 0.0
        %1550 = vmatpush2.msra.mxu0 0.0
        %1551 = vmatprep.subr.mxu0 0.0
        %1552 = vmatpush2.msra.mxu0 0.0
        %1553 = vmatprep.subr.mxu0 0.0
        %1554 = vmatpush2.msra.mxu0 0.0
        %1555 = vmatprep.subr.mxu0 0.0
        %1556 = vmatpush2.msra.mxu0 0.0
        %1557 = vmatprep.subr.mxu0 0.0
        %1558 = vmatpush2.msra.mxu0 0.0
        %1559 = vmatprep.subr.mxu0 0.0
        %1560 = vmatpush2.msra.mxu0 0.0
        %1561 = vmatprep.subr.mxu0 0.0
        %1562 = vmatpush2.msra.mxu0 0.0
        %1563 = vmatprep.subr.mxu0 0.0
        %1564 = vmatpush2.msra.mxu0 0.0
        %1565 = vmatprep.subr.mxu0 0.0
        %1566 = vmatpush2.msra.mxu0 0.0
        %1567 = vmatprep.subr.mxu0 0.0
        %1568 = vmatpush2.msra.mxu0 0.0
        %1569 = vmatprep.subr.mxu0 0.0
        %1570 = vmatpush2.msra.mxu0 0.0
        %1571 = vmatprep.subr.mxu0 0.0
        %1572 = vmatpush2.msra.mxu0 0.0
        %1573 = vmatprep.subr.mxu0 0.0
        %1574 = vmatpush2.msra.mxu0 0.0
        %1575 = vmatprep.mubr.f32.mxu0 0.0
        %1576 = vmatmul.mubr.f32.gmra.mxu0 %v1500
        %v1577 = vpop.f32.mrf.mxu0
        %v1578 = vadd.f32 %v1482, %v1577
        %v1579 = vpop.f32.mrf.mxu0
        %1580 = vmatprep.mubr.f32.mxu0 0.0
        %1581 = vmatmul.mubr.f32.gmra.mxu0 %v1503
        %v1582 = vpop.f32.mrf.mxu0
        %v1583 = vadd.f32 %v1487, %v1582
        %v1584 = vpop.f32.mrf.mxu0
        %1585 = vmatprep.mubr.f32.mxu0 0.0
        %1586 = vmatmul.mubr.f32.gmra.mxu0 %v1506
        %v1587 = vpop.f32.mrf.mxu0
        %v1588 = vadd.f32 %v1492, %v1587
        %v1589 = vpop.f32.mrf.mxu0
        %1590 = vmatprep.mubr.f32.mxu0 0.0
        %1591 = vmatmul.mubr.f32.gmra.mxu0 %v1509
        %v1592 = vpop.f32.mrf.mxu0
        %v1593 = vadd.f32 %v1497, %v1592
        %v1594 = vpop.f32.mrf.mxu0
        %1595 = vdwg.mxu0
        %v1596 = vand.u32 2147483647, %v1578
        %vm1597 = vcmp.le.f32.partialorder %v1596, 0.7853982
        %vm1598 = vcmp.lt.s32.totalorder %v1578, 0
        %v1599 = vand.u32 %v1578, 2139095040
        %v1600 = vshrl.u32 %v1599, 23
        %v1601 = vsub.s32 %v1600, 127
        %v1602 = vand.u32 2147483647, %v1578
        %v1603 = vand.u32 %v1602, 8388607
        %v1604 = vor.u32 %v1603, 8388608
        %v1605 = vsub.s32 0, %v1604
        %v1606 = vadd.s32 %v1601, 1
        %vm1607 = vcmp.gt.s32.totalorder %v1606, 0
        %v1608 = vsel %vm1607, %v1606, 0
        %v1609 = vshrl.u32 %v1608, 5
        %v1610 = vand.u32 %v1608, 31
        %v1611 = vsub.s32 32, %v1610
        %v1612 = vshrl.u32 683565275, %v1611
        %v1613 = vshll.u32 683565275, %v1610
        %v1614 = vshrl.u32 2475754826, %v1611
        %v1615 = vor.u32 %v1613, %v1614
        %v1616 = vshll.u32 2475754826, %v1610
        %v1617 = vshrl.u32 2131351028, %v1611
        %v1618 = vor.u32 %v1616, %v1617
        %v1619 = vshll.u32 2131351028, %v1610
        %v1620 = vshrl.u32 2102212464, %v1611
        %v1621 = vor.u32 %v1619, %v1620
        %v1622 = vshll.u32 2102212464, %v1610
        %v1623 = vshrl.u32 920167782, %v1611
        %v1624 = vor.u32 %v1622, %v1623
        %v1625 = vshll.u32 920167782, %v1610
        %v1626 = vshrl.u32 1326507024, %v1611
        %v1627 = vor.u32 %v1625, %v1626
        %vm1628 = vcmp.lt.s32.totalorder %v1609, 1
        %vm1629 = vcmp.lt.s32.totalorder %v1609, 2
        %vm1630 = vcmp.lt.s32.totalorder %v1609, 3
        %vm1631 = vcmp.lt.s32.totalorder %v1609, 4
        %v1632 = vsel %vm1628, %v1612, %v1615
        %v1633 = vsel %vm1631, %v1621, 2102212464
        %v1634 = vsel %vm1630, %v1618, %v1633
        %v1635 = vsel %vm1629, %v1632, %v1634
        %v1636 = vsel %vm1628, %v1615, %v1618
        %v1637 = vsel %vm1631, %v1624, 920167782
        %v1638 = vsel %vm1630, %v1621, %v1637
        %v1639 = vsel %vm1629, %v1636, %v1638
        %v1640 = vsel %vm1628, %v1618, %v1621
        %v1641 = vsel %vm1631, %v1627, 1326507024
        %v1642 = vsel %vm1630, %v1624, %v1641
        %v1643 = vsel %vm1629, %v1640, %v1642
        %v1644 = vshll.u32 %v1604, 8
        %v1645 = vmul.u32.u64.compose %v1644, %v1643
        %v1646 = vextract.low.u32 %v1645
        %v1647 = vextract.high.u32 %v1645
        %v1648 = vmul.u32.u64.compose %v1644, %v1639
        %v1649 = vextract.low.u32 %v1648
        %v1650 = vextract.high.u32 %v1648
        %v1651 = vmul.u32 %v1644, %v1635
        %v1652 = vadd.s32 %v1647, %v1649
        %vm1653 = vc.u32 %v1647, %v1649
        %v1654 = vadd.s32 %v1650, 1
        %v1655 = vsel %vm1653, %v1654, %v1650
        %v1656 = vadd.s32 %v1651, %v1655
        %v1657 = vadd.s32 %v1656, 536870912
        %v1658 = vshrl.u32 %v1657, 30
        %v1659 = vshll.u32 %v1658, 30
        %v1660 = vsub.s32 %v1656, %v1659
        %vm1661 = vcmp.lt.s32.totalorder %v1660, 0
        %v1662 = vsub.s32 0, %v1660
        %v1663 = vsel %vm1661, %v1662, %v1660
        %v1664 = vclz %v1663
        %v1665 = vsub.s32 %v1664, 2
        %vm1666 = vcmp.gt.s32.totalorder 0, %v1665
        %v1667 = vsel %vm1666, 0, %v1665
        %v1668 = vsub.s32 32, %v1667
        %v1669 = vshll.u32 %v1660, %v1667
        %v1670 = vshrl.u32 %v1652, %v1668
        %v1671 = vor.u32 %v1669, %v1670
        %v1672 = vsub.s32 4294967266, %v1667
        %v1673 = vadd.s32 %v1672, 127
        %v1674 = vshll.u32 %v1673, 23
        %v1675 = vor.u32 4788187, %v1674
        %v1676 = vand.u32 2147483647, %v1675
        %v1678 = vcvt.s32.f32 %v1671
        %v1679 = vmul.f32 %v1678, %v1676
        %v1680 = vxor.u32 %v1679, 2147483648
        %v1681 = vsel %vm1598, %v1680, %v1679
        %v1682 = vsub.s32 4, %v1658
        %v1683 = vsel %vm1598, %v1682, %v1658
        %v1684 = vsel %vm1597, %v1578, %v1681
        %v1685 = vsel %vm1597, 0, %v1683
        %v1686 = vcosq.f32.pop %v1684
        %v1687 = vsinq.f32.pop %v1684
        %vm1688 = vweird.f32 %v1578
        %v1689 = vadd.s32 %v1685, 3
        %v1690 = vand.u32 %v1689, 3
        %vm1691 = vcmp.lt.s32.totalorder %v1690, 2
        %vm1692 = vcmp.eq.s32.totalorder %v1690, 0
        %v1693 = vxor.u32 %v1687, 2147483648
        %v1694 = vsel %vm1692, %v1686, %v1693
        %vm1695 = vcmp.eq.s32.totalorder %v1690, 2
        %v1696 = vxor.u32 %v1686, 2147483648
        %v1697 = vsel %vm1695, %v1696, %v1687
        %v1698 = vsel %vm1691, %v1694, %v1697
        %v1699 = vsel %vm1688, nan, %v1698
        %v1700 = vand.u32 2147483647, %v1583
        %vm1701 = vcmp.le.f32.partialorder %v1700, 0.7853982
        %vm1702 = vcmp.lt.s32.totalorder %v1583, 0
        %v1703 = vand.u32 %v1583, 2139095040
        %v1704 = vshrl.u32 %v1703, 23
        %v1705 = vsub.s32 %v1704, 127
        %v1706 = vand.u32 2147483647, %v1583
        %v1707 = vand.u32 %v1706, 8388607
        %v1708 = vor.u32 %v1707, 8388608
        %v1709 = vsub.s32 0, %v1708
        %v1710 = vadd.s32 %v1705, 1
        %vm1711 = vcmp.gt.s32.totalorder %v1710, 0
        %v1712 = vsel %vm1711, %v1710, 0
        %v1713 = vshrl.u32 %v1712, 5
        %v1714 = vand.u32 %v1712, 31
        %v1715 = vsub.s32 32, %v1714
        %v1716 = vshrl.u32 683565275, %v1715
        %v1717 = vshll.u32 683565275, %v1714
        %v1718 = vshrl.u32 2475754826, %v1715
        %v1719 = vor.u32 %v1717, %v1718
        %v1720 = vshll.u32 2475754826, %v1714
        %v1721 = vshrl.u32 2131351028, %v1715
        %v1722 = vor.u32 %v1720, %v1721
        %v1723 = vshll.u32 2131351028, %v1714
        %v1724 = vshrl.u32 2102212464, %v1715
        %v1725 = vor.u32 %v1723, %v1724
        %v1726 = vshll.u32 2102212464, %v1714
        %v1727 = vshrl.u32 920167782, %v1715
        %v1728 = vor.u32 %v1726, %v1727
        %v1729 = vshll.u32 920167782, %v1714
        %v1730 = vshrl.u32 1326507024, %v1715
        %v1731 = vor.u32 %v1729, %v1730
        %vm1732 = vcmp.lt.s32.totalorder %v1713, 1
        %vm1733 = vcmp.lt.s32.totalorder %v1713, 2
        %vm1734 = vcmp.lt.s32.totalorder %v1713, 3
        %vm1735 = vcmp.lt.s32.totalorder %v1713, 4
        %v1736 = vsel %vm1732, %v1716, %v1719
        %v1737 = vsel %vm1735, %v1725, 2102212464
        %v1738 = vsel %vm1734, %v1722, %v1737
        %v1739 = vsel %vm1733, %v1736, %v1738
        %v1740 = vsel %vm1732, %v1719, %v1722
        %v1741 = vsel %vm1735, %v1728, 920167782
        %v1742 = vsel %vm1734, %v1725, %v1741
        %v1743 = vsel %vm1733, %v1740, %v1742
        %v1744 = vsel %vm1732, %v1722, %v1725
        %v1745 = vsel %vm1735, %v1731, 1326507024
        %v1746 = vsel %vm1734, %v1728, %v1745
        %v1747 = vsel %vm1733, %v1744, %v1746
        %v1748 = vshll.u32 %v1708, 8
        %v1749 = vmul.u32.u64.compose %v1748, %v1747
        %v1750 = vextract.low.u32 %v1749
        %v1751 = vextract.high.u32 %v1749
        %v1752 = vmul.u32.u64.compose %v1748, %v1743
        %v1753 = vextract.low.u32 %v1752
        %v1754 = vextract.high.u32 %v1752
        %v1755 = vmul.u32 %v1748, %v1739
        %v1756 = vadd.s32 %v1751, %v1753
        %vm1757 = vc.u32 %v1751, %v1753
        %v1758 = vadd.s32 %v1754, 1
        %v1759 = vsel %vm1757, %v1758, %v1754
        %v1760 = vadd.s32 %v1755, %v1759
        %v1761 = vadd.s32 %v1760, 536870912
        %v1762 = vshrl.u32 %v1761, 30
        %v1763 = vshll.u32 %v1762, 30
        %v1764 = vsub.s32 %v1760, %v1763
        %vm1765 = vcmp.lt.s32.totalorder %v1764, 0
        %v1766 = vsub.s32 0, %v1764
        %v1767 = vsel %vm1765, %v1766, %v1764
        %v1768 = vclz %v1767
        %v1769 = vsub.s32 %v1768, 2
        %vm1770 = vcmp.gt.s32.totalorder 0, %v1769
        %v1771 = vsel %vm1770, 0, %v1769
        %v1772 = vsub.s32 32, %v1771
        %v1773 = vshll.u32 %v1764, %v1771
        %v1774 = vshrl.u32 %v1756, %v1772
        %v1775 = vor.u32 %v1773, %v1774
        %v1776 = vsub.s32 4294967266, %v1771
        %v1777 = vadd.s32 %v1776, 127
        %v1778 = vshll.u32 %v1777, 23
        %v1779 = vor.u32 4788187, %v1778
        %v1780 = vand.u32 2147483647, %v1779
        %v1782 = vcvt.s32.f32 %v1775
        %v1783 = vmul.f32 %v1782, %v1780
        %v1784 = vxor.u32 %v1783, 2147483648
        %v1785 = vsel %vm1702, %v1784, %v1783
        %v1786 = vsub.s32 4, %v1762
        %v1787 = vsel %vm1702, %v1786, %v1762
        %v1788 = vsel %vm1701, %v1583, %v1785
        %v1789 = vsel %vm1701, 0, %v1787
        %v1790 = vcosq.f32.pop %v1788
        %v1791 = vsinq.f32.pop %v1788
        %vm1792 = vweird.f32 %v1583
        %v1793 = vadd.s32 %v1789, 3
        %v1794 = vand.u32 %v1793, 3
        %vm1795 = vcmp.lt.s32.totalorder %v1794, 2
        %vm1796 = vcmp.eq.s32.totalorder %v1794, 0
        %v1797 = vxor.u32 %v1791, 2147483648
        %v1798 = vsel %vm1796, %v1790, %v1797
        %vm1799 = vcmp.eq.s32.totalorder %v1794, 2
        %v1800 = vxor.u32 %v1790, 2147483648
        %v1801 = vsel %vm1799, %v1800, %v1791
        %v1802 = vsel %vm1795, %v1798, %v1801
        %v1803 = vsel %vm1792, nan, %v1802
        %v1804 = vand.u32 2147483647, %v1588
        %vm1805 = vcmp.le.f32.partialorder %v1804, 0.7853982
        %vm1806 = vcmp.lt.s32.totalorder %v1588, 0
        %v1807 = vand.u32 %v1588, 2139095040
        %v1808 = vshrl.u32 %v1807, 23
        %v1809 = vsub.s32 %v1808, 127
        %v1810 = vand.u32 2147483647, %v1588
        %v1811 = vand.u32 %v1810, 8388607
        %v1812 = vor.u32 %v1811, 8388608
        %v1813 = vsub.s32 0, %v1812
        %v1814 = vadd.s32 %v1809, 1
        %vm1815 = vcmp.gt.s32.totalorder %v1814, 0
        %v1816 = vsel %vm1815, %v1814, 0
        %v1817 = vshrl.u32 %v1816, 5
        %v1818 = vand.u32 %v1816, 31
        %v1819 = vsub.s32 32, %v1818
        %v1820 = vshrl.u32 683565275, %v1819
        %v1821 = vshll.u32 683565275, %v1818
        %v1822 = vshrl.u32 2475754826, %v1819
        %v1823 = vor.u32 %v1821, %v1822
        %v1824 = vshll.u32 2475754826, %v1818
        %v1825 = vshrl.u32 2131351028, %v1819
        %v1826 = vor.u32 %v1824, %v1825
        %v1827 = vshll.u32 2131351028, %v1818
        %v1828 = vshrl.u32 2102212464, %v1819
        %v1829 = vor.u32 %v1827, %v1828
        %v1830 = vshll.u32 2102212464, %v1818
        %v1831 = vshrl.u32 920167782, %v1819
        %v1832 = vor.u32 %v1830, %v1831
        %v1833 = vshll.u32 920167782, %v1818
        %v1834 = vshrl.u32 1326507024, %v1819
        %v1835 = vor.u32 %v1833, %v1834
        %vm1836 = vcmp.lt.s32.totalorder %v1817, 1
        %vm1837 = vcmp.lt.s32.totalorder %v1817, 2
        %vm1838 = vcmp.lt.s32.totalorder %v1817, 3
        %vm1839 = vcmp.lt.s32.totalorder %v1817, 4
        %v1840 = vsel %vm1836, %v1820, %v1823
        %v1841 = vsel %vm1839, %v1829, 2102212464
        %v1842 = vsel %vm1838, %v1826, %v1841
        %v1843 = vsel %vm1837, %v1840, %v1842
        %v1844 = vsel %vm1836, %v1823, %v1826
        %v1845 = vsel %vm1839, %v1832, 920167782
        %v1846 = vsel %vm1838, %v1829, %v1845
        %v1847 = vsel %vm1837, %v1844, %v1846
        %v1848 = vsel %vm1836, %v1826, %v1829
        %v1849 = vsel %vm1839, %v1835, 1326507024
        %v1850 = vsel %vm1838, %v1832, %v1849
        %v1851 = vsel %vm1837, %v1848, %v1850
        %v1852 = vshll.u32 %v1812, 8
        %v1853 = vmul.u32.u64.compose %v1852, %v1851
        %v1854 = vextract.low.u32 %v1853
        %v1855 = vextract.high.u32 %v1853
        %v1856 = vmul.u32.u64.compose %v1852, %v1847
        %v1857 = vextract.low.u32 %v1856
        %v1858 = vextract.high.u32 %v1856
        %v1859 = vmul.u32 %v1852, %v1843
        %v1860 = vadd.s32 %v1855, %v1857
        %vm1861 = vc.u32 %v1855, %v1857
        %v1862 = vadd.s32 %v1858, 1
        %v1863 = vsel %vm1861, %v1862, %v1858
        %v1864 = vadd.s32 %v1859, %v1863
        %v1865 = vadd.s32 %v1864, 536870912
        %v1866 = vshrl.u32 %v1865, 30
        %v1867 = vshll.u32 %v1866, 30
        %v1868 = vsub.s32 %v1864, %v1867
        %vm1869 = vcmp.lt.s32.totalorder %v1868, 0
        %v1870 = vsub.s32 0, %v1868
        %v1871 = vsel %vm1869, %v1870, %v1868
        %v1872 = vclz %v1871
        %v1873 = vsub.s32 %v1872, 2
        %vm1874 = vcmp.gt.s32.totalorder 0, %v1873
        %v1875 = vsel %vm1874, 0, %v1873
        %v1876 = vsub.s32 32, %v1875
        %v1877 = vshll.u32 %v1868, %v1875
        %v1878 = vshrl.u32 %v1860, %v1876
        %v1879 = vor.u32 %v1877, %v1878
        %v1880 = vsub.s32 4294967266, %v1875
        %v1881 = vadd.s32 %v1880, 127
        %v1882 = vshll.u32 %v1881, 23
        %v1883 = vor.u32 4788187, %v1882
        %v1884 = vand.u32 2147483647, %v1883
        %v1886 = vcvt.s32.f32 %v1879
        %v1887 = vmul.f32 %v1886, %v1884
        %v1888 = vxor.u32 %v1887, 2147483648
        %v1889 = vsel %vm1806, %v1888, %v1887
        %v1890 = vsub.s32 4, %v1866
        %v1891 = vsel %vm1806, %v1890, %v1866
        %v1892 = vsel %vm1805, %v1588, %v1889
        %v1893 = vsel %vm1805, 0, %v1891
        %v1894 = vcosq.f32.pop %v1892
        %v1895 = vsinq.f32.pop %v1892
        %vm1896 = vweird.f32 %v1588
        %v1897 = vadd.s32 %v1893, 3
        %v1898 = vand.u32 %v1897, 3
        %vm1899 = vcmp.lt.s32.totalorder %v1898, 2
        %vm1900 = vcmp.eq.s32.totalorder %v1898, 0
        %v1901 = vxor.u32 %v1895, 2147483648
        %v1902 = vsel %vm1900, %v1894, %v1901
        %vm1903 = vcmp.eq.s32.totalorder %v1898, 2
        %v1904 = vxor.u32 %v1894, 2147483648
        %v1905 = vsel %vm1903, %v1904, %v1895
        %v1906 = vsel %vm1899, %v1902, %v1905
        %v1907 = vsel %vm1896, nan, %v1906
        %v1908 = vand.u32 2147483647, %v1593
        %vm1909 = vcmp.le.f32.partialorder %v1908, 0.7853982
        %vm1910 = vcmp.lt.s32.totalorder %v1593, 0
        %v1911 = vand.u32 %v1593, 2139095040
        %v1912 = vshrl.u32 %v1911, 23
        %v1913 = vsub.s32 %v1912, 127
        %v1914 = vand.u32 2147483647, %v1593
        %v1915 = vand.u32 %v1914, 8388607
        %v1916 = vor.u32 %v1915, 8388608
        %v1917 = vsub.s32 0, %v1916
        %v1918 = vadd.s32 %v1913, 1
        %vm1919 = vcmp.gt.s32.totalorder %v1918, 0
        %v1920 = vsel %vm1919, %v1918, 0
        %v1921 = vshrl.u32 %v1920, 5
        %v1922 = vand.u32 %v1920, 31
        %v1923 = vsub.s32 32, %v1922
        %v1924 = vshrl.u32 683565275, %v1923
        %v1925 = vshll.u32 683565275, %v1922
        %v1926 = vshrl.u32 2475754826, %v1923
        %v1927 = vor.u32 %v1925, %v1926
        %v1928 = vshll.u32 2475754826, %v1922
        %v1929 = vshrl.u32 2131351028, %v1923
        %v1930 = vor.u32 %v1928, %v1929
        %v1931 = vshll.u32 2131351028, %v1922
        %v1932 = vshrl.u32 2102212464, %v1923
        %v1933 = vor.u32 %v1931, %v1932
        %v1934 = vshll.u32 2102212464, %v1922
        %v1935 = vshrl.u32 920167782, %v1923
        %v1936 = vor.u32 %v1934, %v1935
        %v1937 = vshll.u32 920167782, %v1922
        %v1938 = vshrl.u32 1326507024, %v1923
        %v1939 = vor.u32 %v1937, %v1938
        %vm1940 = vcmp.lt.s32.totalorder %v1921, 1
        %vm1941 = vcmp.lt.s32.totalorder %v1921, 2
        %vm1942 = vcmp.lt.s32.totalorder %v1921, 3
        %vm1943 = vcmp.lt.s32.totalorder %v1921, 4
        %v1944 = vsel %vm1940, %v1924, %v1927
        %v1945 = vsel %vm1943, %v1933, 2102212464
        %v1946 = vsel %vm1942, %v1930, %v1945
        %v1947 = vsel %vm1941, %v1944, %v1946
        %v1948 = vsel %vm1940, %v1927, %v1930
        %v1949 = vsel %vm1943, %v1936, 920167782
        %v1950 = vsel %vm1942, %v1933, %v1949
        %v1951 = vsel %vm1941, %v1948, %v1950
        %v1952 = vsel %vm1940, %v1930, %v1933
        %v1953 = vsel %vm1943, %v1939, 1326507024
        %v1954 = vsel %vm1942, %v1936, %v1953
        %v1955 = vsel %vm1941, %v1952, %v1954
        %v1956 = vshll.u32 %v1916, 8
        %v1957 = vmul.u32.u64.compose %v1956, %v1955
        %v1958 = vextract.low.u32 %v1957
        %v1959 = vextract.high.u32 %v1957
        %v1960 = vmul.u32.u64.compose %v1956, %v1951
        %v1961 = vextract.low.u32 %v1960
        %v1962 = vextract.high.u32 %v1960
        %v1963 = vmul.u32 %v1956, %v1947
        %v1964 = vadd.s32 %v1959, %v1961
        %vm1965 = vc.u32 %v1959, %v1961
        %v1966 = vadd.s32 %v1962, 1
        %v1967 = vsel %vm1965, %v1966, %v1962
        %v1968 = vadd.s32 %v1963, %v1967
        %v1969 = vadd.s32 %v1968, 536870912
        %v1970 = vshrl.u32 %v1969, 30
        %v1971 = vshll.u32 %v1970, 30
        %v1972 = vsub.s32 %v1968, %v1971
        %vm1973 = vcmp.lt.s32.totalorder %v1972, 0
        %v1974 = vsub.s32 0, %v1972
        %v1975 = vsel %vm1973, %v1974, %v1972
        %v1976 = vclz %v1975
        %v1977 = vsub.s32 %v1976, 2
        %vm1978 = vcmp.gt.s32.totalorder 0, %v1977
        %v1979 = vsel %vm1978, 0, %v1977
        %v1980 = vsub.s32 32, %v1979
        %v1981 = vshll.u32 %v1972, %v1979
        %v1982 = vshrl.u32 %v1964, %v1980
        %v1983 = vor.u32 %v1981, %v1982
        %v1984 = vsub.s32 4294967266, %v1979
        %v1985 = vadd.s32 %v1984, 127
        %v1986 = vshll.u32 %v1985, 23
        %v1987 = vor.u32 4788187, %v1986
        %v1988 = vand.u32 2147483647, %v1987
        %v1990 = vcvt.s32.f32 %v1983
        %v1991 = vmul.f32 %v1990, %v1988
        %v1992 = vxor.u32 %v1991, 2147483648
        %v1993 = vsel %vm1910, %v1992, %v1991
        %v1994 = vsub.s32 4, %v1970
        %v1995 = vsel %vm1910, %v1994, %v1970
        %v1996 = vsel %vm1909, %v1593, %v1993
        %v1997 = vsel %vm1909, 0, %v1995
        %v1998 = vcosq.f32.pop %v1996
        %v1999 = vsinq.f32.pop %v1996
        %vm2000 = vweird.f32 %v1593
        %v2001 = vadd.s32 %v1997, 3
        %v2002 = vand.u32 %v2001, 3
        %vm2003 = vcmp.lt.s32.totalorder %v2002, 2
        %vm2004 = vcmp.eq.s32.totalorder %v2002, 0
        %v2005 = vxor.u32 %v1999, 2147483648
        %v2006 = vsel %vm2004, %v1998, %v2005
        %vm2007 = vcmp.eq.s32.totalorder %v2002, 2
        %v2008 = vxor.u32 %v1998, 2147483648
        %v2009 = vsel %vm2007, %v2008, %v1999
        %v2010 = vsel %vm2003, %v2006, %v2009
        %v2011 = vsel %vm2000, nan, %v2010
        %v2012 = vld [vmem:[%s7] sm:$0xff]
        %v2013 = vld [vmem:[%s7 + $0x8] sm:$0xff]
        %v2014 = vld [vmem:[%s7 + $0x10] sm:$0xff]
        %v2015 = vld [vmem:[%s7 + $0x18] sm:$0xff]
        %v2016 = vld [vmem:[%s8] sm:$0xff]
        %v2017 = vld [vmem:[%s8 + $0x8] sm:$0xff]
        %v2018 = vld [vmem:[%s8 + $0x10] sm:$0xff]
        %v2019 = vld [vmem:[%s8 + $0x18] sm:$0xff]
        %2021 = vset.pattern.permute.xlu0 0
        %2022 = vperm.xlu0 %2021, %v2016
        %v2023 = vpop.permute.xlu0 %2022
        %2026 = vset.pattern.permute.xlu0 0
        %2027 = vperm.xlu0 %2026, %v2017
        %v2028 = vpop.permute.xlu0 %2027
        %2031 = vset.pattern.permute.xlu0 0
        %2032 = vperm.xlu0 %2031, %v2018
        %v2033 = vpop.permute.xlu0 %2032
        %2036 = vset.pattern.permute.xlu0 0
        %2037 = vperm.xlu0 %2036, %v2019
        %v2038 = vpop.permute.xlu0 %2037
        %v2041 = vsel %vm957, %v2012, 0
        %v2044 = vsel %vm957, %v2013, 0
        %v2047 = vsel %vm957, %v2014, 0
        %v2050 = vsel %vm957, %v2015, 0
        %2052 = vmatprep.subr.mxu0 0.0
        %2053 = vmatpush1.msra.mxu0 0.0
        %2054 = vmatprep.subr.mxu0 0.0
        %2055 = vmatpush1.msra.mxu0 0.0
        %2056 = vmatprep.subr.mxu0 0.0
        %2057 = vmatpush1.msra.mxu0 0.0
        %2058 = vmatprep.subr.mxu0 0.0
        %2059 = vmatpush1.msra.mxu0 0.0
        %2060 = vmatprep.subr.mxu0 0.0
        %2061 = vmatpush1.msra.mxu0 0.0
        %2062 = vmatprep.subr.mxu0 0.0
        %2063 = vmatpush1.msra.mxu0 0.0
        %2064 = vmatprep.subr.mxu0 0.0
        %2065 = vmatpush1.msra.mxu0 0.0
        %2066 = vmatprep.subr.mxu0 0.0
        %2067 = vmatpush1.msra.mxu0 0.0
        %2068 = vmatprep.subr.mxu0 0.0
        %2069 = vmatpush1.msra.mxu0 0.0
        %2070 = vmatprep.subr.mxu0 0.0
        %2071 = vmatpush1.msra.mxu0 0.0
        %2072 = vmatprep.subr.mxu0 0.0
        %2073 = vmatpush1.msra.mxu0 0.0
        %2074 = vmatprep.subr.mxu0 0.0
        %2075 = vmatpush1.msra.mxu0 0.0
        %2076 = vmatprep.subr.mxu0 0.0
        %2077 = vmatpush1.msra.mxu0 %v2011
        %2078 = vmatprep.subr.mxu0 0.0
        %2079 = vmatpush1.msra.mxu0 %v1907
        %2080 = vmatprep.subr.mxu0 0.0
        %2081 = vmatpush1.msra.mxu0 %v1803
        %2082 = vmatprep.subr.mxu0 0.0
        %2083 = vmatpush1.msra.mxu0 %v1699
        %2084 = vmatprep.subr.mxu0 0.0
        %2085 = vmatpush2.msra.mxu0 0.0
        %2086 = vmatprep.subr.mxu0 0.0
        %2087 = vmatpush2.msra.mxu0 0.0
        %2088 = vmatprep.subr.mxu0 0.0
        %2089 = vmatpush2.msra.mxu0 0.0
        %2090 = vmatprep.subr.mxu0 0.0
        %2091 = vmatpush2.msra.mxu0 0.0
        %2092 = vmatprep.subr.mxu0 0.0
        %2093 = vmatpush2.msra.mxu0 0.0
        %2094 = vmatprep.subr.mxu0 0.0
        %2095 = vmatpush2.msra.mxu0 0.0
        %2096 = vmatprep.subr.mxu0 0.0
        %2097 = vmatpush2.msra.mxu0 0.0
        %2098 = vmatprep.subr.mxu0 0.0
        %2099 = vmatpush2.msra.mxu0 0.0
        %2100 = vmatprep.subr.mxu0 0.0
        %2101 = vmatpush2.msra.mxu0 0.0
        %2102 = vmatprep.subr.mxu0 0.0
        %2103 = vmatpush2.msra.mxu0 0.0
        %2104 = vmatprep.subr.mxu0 0.0
        %2105 = vmatpush2.msra.mxu0 0.0
        %2106 = vmatprep.subr.mxu0 0.0
        %2107 = vmatpush2.msra.mxu0 0.0
        %2108 = vmatprep.subr.mxu0 0.0
        %2109 = vmatpush2.msra.mxu0 0.0
        %2110 = vmatprep.subr.mxu0 0.0
        %2111 = vmatpush2.msra.mxu0 0.0
        %2112 = vmatprep.subr.mxu0 0.0
        %2113 = vmatpush2.msra.mxu0 0.0
        %2114 = vmatprep.subr.mxu0 0.0
        %2115 = vmatpush2.msra.mxu0 0.0
        %2116 = vmatprep.mubr.f32.mxu0 0.0
        %2117 = vmatmul.mubr.f32.gmra.mxu0 %v2041
        %v2118 = vpop.f32.mrf.mxu0
        %v2119 = vadd.f32 %v2023, %v2118
        %v2120 = vpop.f32.mrf.mxu0
        %2121 = vmatprep.mubr.f32.mxu0 0.0
        %2122 = vmatmul.mubr.f32.gmra.mxu0 %v2044
        %v2123 = vpop.f32.mrf.mxu0
        %v2124 = vadd.f32 %v2028, %v2123
        %v2125 = vpop.f32.mrf.mxu0
        %2126 = vmatprep.mubr.f32.mxu0 0.0
        %2127 = vmatmul.mubr.f32.gmra.mxu0 %v2047
        %v2128 = vpop.f32.mrf.mxu0
        %v2129 = vadd.f32 %v2033, %v2128
        %v2130 = vpop.f32.mrf.mxu0
        %2131 = vmatprep.mubr.f32.mxu0 0.0
        %2132 = vmatmul.mubr.f32.gmra.mxu0 %v2050
        %v2133 = vpop.f32.mrf.mxu0
        %v2134 = vadd.f32 %v2038, %v2133
        %v2135 = vpop.f32.mrf.mxu0
        %2136 = vdwg.mxu0
        %v2137 = vand.u32 2147483647, %v2119
        %vm2138 = vcmp.le.f32.partialorder %v2137, 0.7853982
        %vm2139 = vcmp.lt.s32.totalorder %v2119, 0
        %v2140 = vand.u32 %v2119, 2139095040
        %v2141 = vshrl.u32 %v2140, 23
        %v2142 = vsub.s32 %v2141, 127
        %v2143 = vand.u32 2147483647, %v2119
        %v2144 = vand.u32 %v2143, 8388607
        %v2145 = vor.u32 %v2144, 8388608
        %v2146 = vsub.s32 0, %v2145
        %v2147 = vadd.s32 %v2142, 1
        %vm2148 = vcmp.gt.s32.totalorder %v2147, 0
        %v2149 = vsel %vm2148, %v2147, 0
        %v2150 = vshrl.u32 %v2149, 5
        %v2151 = vand.u32 %v2149, 31
        %v2152 = vsub.s32 32, %v2151
        %v2153 = vshrl.u32 683565275, %v2152
        %v2154 = vshll.u32 683565275, %v2151
        %v2155 = vshrl.u32 2475754826, %v2152
        %v2156 = vor.u32 %v2154, %v2155
        %v2157 = vshll.u32 2475754826, %v2151
        %v2158 = vshrl.u32 2131351028, %v2152
        %v2159 = vor.u32 %v2157, %v2158
        %v2160 = vshll.u32 2131351028, %v2151
        %v2161 = vshrl.u32 2102212464, %v2152
        %v2162 = vor.u32 %v2160, %v2161
        %v2163 = vshll.u32 2102212464, %v2151
        %v2164 = vshrl.u32 920167782, %v2152
        %v2165 = vor.u32 %v2163, %v2164
        %v2166 = vshll.u32 920167782, %v2151
        %v2167 = vshrl.u32 1326507024, %v2152
        %v2168 = vor.u32 %v2166, %v2167
        %vm2169 = vcmp.lt.s32.totalorder %v2150, 1
        %vm2170 = vcmp.lt.s32.totalorder %v2150, 2
        %vm2171 = vcmp.lt.s32.totalorder %v2150, 3
        %vm2172 = vcmp.lt.s32.totalorder %v2150, 4
        %v2173 = vsel %vm2169, %v2153, %v2156
        %v2174 = vsel %vm2172, %v2162, 2102212464
        %v2175 = vsel %vm2171, %v2159, %v2174
        %v2176 = vsel %vm2170, %v2173, %v2175
        %v2177 = vsel %vm2169, %v2156, %v2159
        %v2178 = vsel %vm2172, %v2165, 920167782
        %v2179 = vsel %vm2171, %v2162, %v2178
        %v2180 = vsel %vm2170, %v2177, %v2179
        %v2181 = vsel %vm2169, %v2159, %v2162
        %v2182 = vsel %vm2172, %v2168, 1326507024
        %v2183 = vsel %vm2171, %v2165, %v2182
        %v2184 = vsel %vm2170, %v2181, %v2183
        %v2185 = vshll.u32 %v2145, 8
        %v2186 = vmul.u32.u64.compose %v2185, %v2184
        %v2187 = vextract.low.u32 %v2186
        %v2188 = vextract.high.u32 %v2186
        %v2189 = vmul.u32.u64.compose %v2185, %v2180
        %v2190 = vextract.low.u32 %v2189
        %v2191 = vextract.high.u32 %v2189
        %v2192 = vmul.u32 %v2185, %v2176
        %v2193 = vadd.s32 %v2188, %v2190
        %vm2194 = vc.u32 %v2188, %v2190
        %v2195 = vadd.s32 %v2191, 1
        %v2196 = vsel %vm2194, %v2195, %v2191
        %v2197 = vadd.s32 %v2192, %v2196
        %v2198 = vadd.s32 %v2197, 536870912
        %v2199 = vshrl.u32 %v2198, 30
        %v2200 = vshll.u32 %v2199, 30
        %v2201 = vsub.s32 %v2197, %v2200
        %vm2202 = vcmp.lt.s32.totalorder %v2201, 0
        %v2203 = vsub.s32 0, %v2201
        %v2204 = vsel %vm2202, %v2203, %v2201
        %v2205 = vclz %v2204
        %v2206 = vsub.s32 %v2205, 2
        %vm2207 = vcmp.gt.s32.totalorder 0, %v2206
        %v2208 = vsel %vm2207, 0, %v2206
        %v2209 = vsub.s32 32, %v2208
        %v2210 = vshll.u32 %v2201, %v2208
        %v2211 = vshrl.u32 %v2193, %v2209
        %v2212 = vor.u32 %v2210, %v2211
        %v2213 = vsub.s32 4294967266, %v2208
        %v2214 = vadd.s32 %v2213, 127
        %v2215 = vshll.u32 %v2214, 23
        %v2216 = vor.u32 4788187, %v2215
        %v2217 = vand.u32 2147483647, %v2216
        %v2219 = vcvt.s32.f32 %v2212
        %v2220 = vmul.f32 %v2219, %v2217
        %v2221 = vxor.u32 %v2220, 2147483648
        %v2222 = vsel %vm2139, %v2221, %v2220
        %v2223 = vsub.s32 4, %v2199
        %v2224 = vsel %vm2139, %v2223, %v2199
        %v2225 = vsel %vm2138, %v2119, %v2222
        %v2226 = vsel %vm2138, 0, %v2224
        %v2227 = vcosq.f32.pop %v2225
        %v2228 = vsinq.f32.pop %v2225
        %vm2229 = vweird.f32 %v2119
        %v2230 = vadd.s32 %v2226, 3
        %v2231 = vand.u32 %v2230, 3
        %vm2232 = vcmp.lt.s32.totalorder %v2231, 2
        %vm2233 = vcmp.eq.s32.totalorder %v2231, 0
        %v2234 = vxor.u32 %v2228, 2147483648
        %v2235 = vsel %vm2233, %v2227, %v2234
        %vm2236 = vcmp.eq.s32.totalorder %v2231, 2
        %v2237 = vxor.u32 %v2227, 2147483648
        %v2238 = vsel %vm2236, %v2237, %v2228
        %v2239 = vsel %vm2232, %v2235, %v2238
        %v2240 = vsel %vm2229, nan, %v2239
        %v2241 = vand.u32 2147483647, %v2124
        %vm2242 = vcmp.le.f32.partialorder %v2241, 0.7853982
        %vm2243 = vcmp.lt.s32.totalorder %v2124, 0
        %v2244 = vand.u32 %v2124, 2139095040
        %v2245 = vshrl.u32 %v2244, 23
        %v2246 = vsub.s32 %v2245, 127
        %v2247 = vand.u32 2147483647, %v2124
        %v2248 = vand.u32 %v2247, 8388607
        %v2249 = vor.u32 %v2248, 8388608
        %v2250 = vsub.s32 0, %v2249
        %v2251 = vadd.s32 %v2246, 1
        %vm2252 = vcmp.gt.s32.totalorder %v2251, 0
        %v2253 = vsel %vm2252, %v2251, 0
        %v2254 = vshrl.u32 %v2253, 5
        %v2255 = vand.u32 %v2253, 31
        %v2256 = vsub.s32 32, %v2255
        %v2257 = vshrl.u32 683565275, %v2256
        %v2258 = vshll.u32 683565275, %v2255
        %v2259 = vshrl.u32 2475754826, %v2256
        %v2260 = vor.u32 %v2258, %v2259
        %v2261 = vshll.u32 2475754826, %v2255
        %v2262 = vshrl.u32 2131351028, %v2256
        %v2263 = vor.u32 %v2261, %v2262
        %v2264 = vshll.u32 2131351028, %v2255
        %v2265 = vshrl.u32 2102212464, %v2256
        %v2266 = vor.u32 %v2264, %v2265
        %v2267 = vshll.u32 2102212464, %v2255
        %v2268 = vshrl.u32 920167782, %v2256
        %v2269 = vor.u32 %v2267, %v2268
        %v2270 = vshll.u32 920167782, %v2255
        %v2271 = vshrl.u32 1326507024, %v2256
        %v2272 = vor.u32 %v2270, %v2271
        %vm2273 = vcmp.lt.s32.totalorder %v2254, 1
        %vm2274 = vcmp.lt.s32.totalorder %v2254, 2
        %vm2275 = vcmp.lt.s32.totalorder %v2254, 3
        %vm2276 = vcmp.lt.s32.totalorder %v2254, 4
        %v2277 = vsel %vm2273, %v2257, %v2260
        %v2278 = vsel %vm2276, %v2266, 2102212464
        %v2279 = vsel %vm2275, %v2263, %v2278
        %v2280 = vsel %vm2274, %v2277, %v2279
        %v2281 = vsel %vm2273, %v2260, %v2263
        %v2282 = vsel %vm2276, %v2269, 920167782
        %v2283 = vsel %vm2275, %v2266, %v2282
        %v2284 = vsel %vm2274, %v2281, %v2283
        %v2285 = vsel %vm2273, %v2263, %v2266
        %v2286 = vsel %vm2276, %v2272, 1326507024
        %v2287 = vsel %vm2275, %v2269, %v2286
        %v2288 = vsel %vm2274, %v2285, %v2287
        %v2289 = vshll.u32 %v2249, 8
        %v2290 = vmul.u32.u64.compose %v2289, %v2288
        %v2291 = vextract.low.u32 %v2290
        %v2292 = vextract.high.u32 %v2290
        %v2293 = vmul.u32.u64.compose %v2289, %v2284
        %v2294 = vextract.low.u32 %v2293
        %v2295 = vextract.high.u32 %v2293
        %v2296 = vmul.u32 %v2289, %v2280
        %v2297 = vadd.s32 %v2292, %v2294
        %vm2298 = vc.u32 %v2292, %v2294
        %v2299 = vadd.s32 %v2295, 1
        %v2300 = vsel %vm2298, %v2299, %v2295
        %v2301 = vadd.s32 %v2296, %v2300
        %v2302 = vadd.s32 %v2301, 536870912
        %v2303 = vshrl.u32 %v2302, 30
        %v2304 = vshll.u32 %v2303, 30
        %v2305 = vsub.s32 %v2301, %v2304
        %vm2306 = vcmp.lt.s32.totalorder %v2305, 0
        %v2307 = vsub.s32 0, %v2305
        %v2308 = vsel %vm2306, %v2307, %v2305
        %v2309 = vclz %v2308
        %v2310 = vsub.s32 %v2309, 2
        %vm2311 = vcmp.gt.s32.totalorder 0, %v2310
        %v2312 = vsel %vm2311, 0, %v2310
        %v2313 = vsub.s32 32, %v2312
        %v2314 = vshll.u32 %v2305, %v2312
        %v2315 = vshrl.u32 %v2297, %v2313
        %v2316 = vor.u32 %v2314, %v2315
        %v2317 = vsub.s32 4294967266, %v2312
        %v2318 = vadd.s32 %v2317, 127
        %v2319 = vshll.u32 %v2318, 23
        %v2320 = vor.u32 4788187, %v2319
        %v2321 = vand.u32 2147483647, %v2320
        %v2323 = vcvt.s32.f32 %v2316
        %v2324 = vmul.f32 %v2323, %v2321
        %v2325 = vxor.u32 %v2324, 2147483648
        %v2326 = vsel %vm2243, %v2325, %v2324
        %v2327 = vsub.s32 4, %v2303
        %v2328 = vsel %vm2243, %v2327, %v2303
        %v2329 = vsel %vm2242, %v2124, %v2326
        %v2330 = vsel %vm2242, 0, %v2328
        %v2331 = vcosq.f32.pop %v2329
        %v2332 = vsinq.f32.pop %v2329
        %vm2333 = vweird.f32 %v2124
        %v2334 = vadd.s32 %v2330, 3
        %v2335 = vand.u32 %v2334, 3
        %vm2336 = vcmp.lt.s32.totalorder %v2335, 2
        %vm2337 = vcmp.eq.s32.totalorder %v2335, 0
        %v2338 = vxor.u32 %v2332, 2147483648
        %v2339 = vsel %vm2337, %v2331, %v2338
        %vm2340 = vcmp.eq.s32.totalorder %v2335, 2
        %v2341 = vxor.u32 %v2331, 2147483648
        %v2342 = vsel %vm2340, %v2341, %v2332
        %v2343 = vsel %vm2336, %v2339, %v2342
        %v2344 = vsel %vm2333, nan, %v2343
        %v2345 = vand.u32 2147483647, %v2129
        %vm2346 = vcmp.le.f32.partialorder %v2345, 0.7853982
        %vm2347 = vcmp.lt.s32.totalorder %v2129, 0
        %v2348 = vand.u32 %v2129, 2139095040
        %v2349 = vshrl.u32 %v2348, 23
        %v2350 = vsub.s32 %v2349, 127
        %v2351 = vand.u32 2147483647, %v2129
        %v2352 = vand.u32 %v2351, 8388607
        %v2353 = vor.u32 %v2352, 8388608
        %v2354 = vsub.s32 0, %v2353
        %v2355 = vadd.s32 %v2350, 1
        %vm2356 = vcmp.gt.s32.totalorder %v2355, 0
        %v2357 = vsel %vm2356, %v2355, 0
        %v2358 = vshrl.u32 %v2357, 5
        %v2359 = vand.u32 %v2357, 31
        %v2360 = vsub.s32 32, %v2359
        %v2361 = vshrl.u32 683565275, %v2360
        %v2362 = vshll.u32 683565275, %v2359
        %v2363 = vshrl.u32 2475754826, %v2360
        %v2364 = vor.u32 %v2362, %v2363
        %v2365 = vshll.u32 2475754826, %v2359
        %v2366 = vshrl.u32 2131351028, %v2360
        %v2367 = vor.u32 %v2365, %v2366
        %v2368 = vshll.u32 2131351028, %v2359
        %v2369 = vshrl.u32 2102212464, %v2360
        %v2370 = vor.u32 %v2368, %v2369
        %v2371 = vshll.u32 2102212464, %v2359
        %v2372 = vshrl.u32 920167782, %v2360
        %v2373 = vor.u32 %v2371, %v2372
        %v2374 = vshll.u32 920167782, %v2359
        %v2375 = vshrl.u32 1326507024, %v2360
        %v2376 = vor.u32 %v2374, %v2375
        %vm2377 = vcmp.lt.s32.totalorder %v2358, 1
        %vm2378 = vcmp.lt.s32.totalorder %v2358, 2
        %vm2379 = vcmp.lt.s32.totalorder %v2358, 3
        %vm2380 = vcmp.lt.s32.totalorder %v2358, 4
        %v2381 = vsel %vm2377, %v2361, %v2364
        %v2382 = vsel %vm2380, %v2370, 2102212464
        %v2383 = vsel %vm2379, %v2367, %v2382
        %v2384 = vsel %vm2378, %v2381, %v2383
        %v2385 = vsel %vm2377, %v2364, %v2367
        %v2386 = vsel %vm2380, %v2373, 920167782
        %v2387 = vsel %vm2379, %v2370, %v2386
        %v2388 = vsel %vm2378, %v2385, %v2387
        %v2389 = vsel %vm2377, %v2367, %v2370
        %v2390 = vsel %vm2380, %v2376, 1326507024
        %v2391 = vsel %vm2379, %v2373, %v2390
        %v2392 = vsel %vm2378, %v2389, %v2391
        %v2393 = vshll.u32 %v2353, 8
        %v2394 = vmul.u32.u64.compose %v2393, %v2392
        %v2395 = vextract.low.u32 %v2394
        %v2396 = vextract.high.u32 %v2394
        %v2397 = vmul.u32.u64.compose %v2393, %v2388
        %v2398 = vextract.low.u32 %v2397
        %v2399 = vextract.high.u32 %v2397
        %v2400 = vmul.u32 %v2393, %v2384
        %v2401 = vadd.s32 %v2396, %v2398
        %vm2402 = vc.u32 %v2396, %v2398
        %v2403 = vadd.s32 %v2399, 1
        %v2404 = vsel %vm2402, %v2403, %v2399
        %v2405 = vadd.s32 %v2400, %v2404
        %v2406 = vadd.s32 %v2405, 536870912
        %v2407 = vshrl.u32 %v2406, 30
        %v2408 = vshll.u32 %v2407, 30
        %v2409 = vsub.s32 %v2405, %v2408
        %vm2410 = vcmp.lt.s32.totalorder %v2409, 0
        %v2411 = vsub.s32 0, %v2409
        %v2412 = vsel %vm2410, %v2411, %v2409
        %v2413 = vclz %v2412
        %v2414 = vsub.s32 %v2413, 2
        %vm2415 = vcmp.gt.s32.totalorder 0, %v2414
        %v2416 = vsel %vm2415, 0, %v2414
        %v2417 = vsub.s32 32, %v2416
        %v2418 = vshll.u32 %v2409, %v2416
        %v2419 = vshrl.u32 %v2401, %v2417
        %v2420 = vor.u32 %v2418, %v2419
        %v2421 = vsub.s32 4294967266, %v2416
        %v2422 = vadd.s32 %v2421, 127
        %v2423 = vshll.u32 %v2422, 23
        %v2424 = vor.u32 4788187, %v2423
        %v2425 = vand.u32 2147483647, %v2424
        %v2427 = vcvt.s32.f32 %v2420
        %v2428 = vmul.f32 %v2427, %v2425
        %v2429 = vxor.u32 %v2428, 2147483648
        %v2430 = vsel %vm2347, %v2429, %v2428
        %v2431 = vsub.s32 4, %v2407
        %v2432 = vsel %vm2347, %v2431, %v2407
        %v2433 = vsel %vm2346, %v2129, %v2430
        %v2434 = vsel %vm2346, 0, %v2432
        %v2435 = vcosq.f32.pop %v2433
        %v2436 = vsinq.f32.pop %v2433
        %vm2437 = vweird.f32 %v2129
        %v2438 = vadd.s32 %v2434, 3
        %v2439 = vand.u32 %v2438, 3
        %vm2440 = vcmp.lt.s32.totalorder %v2439, 2
        %vm2441 = vcmp.eq.s32.totalorder %v2439, 0
        %v2442 = vxor.u32 %v2436, 2147483648
        %v2443 = vsel %vm2441, %v2435, %v2442
        %vm2444 = vcmp.eq.s32.totalorder %v2439, 2
        %v2445 = vxor.u32 %v2435, 2147483648
        %v2446 = vsel %vm2444, %v2445, %v2436
        %v2447 = vsel %vm2440, %v2443, %v2446
        %v2448 = vsel %vm2437, nan, %v2447
        %v2449 = vand.u32 2147483647, %v2134
        %vm2450 = vcmp.le.f32.partialorder %v2449, 0.7853982
        %vm2451 = vcmp.lt.s32.totalorder %v2134, 0
        %v2452 = vand.u32 %v2134, 2139095040
        %v2453 = vshrl.u32 %v2452, 23
        %v2454 = vsub.s32 %v2453, 127
        %v2455 = vand.u32 2147483647, %v2134
        %v2456 = vand.u32 %v2455, 8388607
        %v2457 = vor.u32 %v2456, 8388608
        %v2458 = vsub.s32 0, %v2457
        %v2459 = vadd.s32 %v2454, 1
        %vm2460 = vcmp.gt.s32.totalorder %v2459, 0
        %v2461 = vsel %vm2460, %v2459, 0
        %v2462 = vshrl.u32 %v2461, 5
        %v2463 = vand.u32 %v2461, 31
        %v2464 = vsub.s32 32, %v2463
        %v2465 = vshrl.u32 683565275, %v2464
        %v2466 = vshll.u32 683565275, %v2463
        %v2467 = vshrl.u32 2475754826, %v2464
        %v2468 = vor.u32 %v2466, %v2467
        %v2469 = vshll.u32 2475754826, %v2463
        %v2470 = vshrl.u32 2131351028, %v2464
        %v2471 = vor.u32 %v2469, %v2470
        %v2472 = vshll.u32 2131351028, %v2463
        %v2473 = vshrl.u32 2102212464, %v2464
        %v2474 = vor.u32 %v2472, %v2473
        %v2475 = vshll.u32 2102212464, %v2463
        %v2476 = vshrl.u32 920167782, %v2464
        %v2477 = vor.u32 %v2475, %v2476
        %v2478 = vshll.u32 920167782, %v2463
        %v2479 = vshrl.u32 1326507024, %v2464
        %v2480 = vor.u32 %v2478, %v2479
        %vm2481 = vcmp.lt.s32.totalorder %v2462, 1
        %vm2482 = vcmp.lt.s32.totalorder %v2462, 2
        %vm2483 = vcmp.lt.s32.totalorder %v2462, 3
        %vm2484 = vcmp.lt.s32.totalorder %v2462, 4
        %v2485 = vsel %vm2481, %v2465, %v2468
        %v2486 = vsel %vm2484, %v2474, 2102212464
        %v2487 = vsel %vm2483, %v2471, %v2486
        %v2488 = vsel %vm2482, %v2485, %v2487
        %v2489 = vsel %vm2481, %v2468, %v2471
        %v2490 = vsel %vm2484, %v2477, 920167782
        %v2491 = vsel %vm2483, %v2474, %v2490
        %v2492 = vsel %vm2482, %v2489, %v2491
        %v2493 = vsel %vm2481, %v2471, %v2474
        %v2494 = vsel %vm2484, %v2480, 1326507024
        %v2495 = vsel %vm2483, %v2477, %v2494
        %v2496 = vsel %vm2482, %v2493, %v2495
        %v2497 = vshll.u32 %v2457, 8
        %v2498 = vmul.u32.u64.compose %v2497, %v2496
        %v2499 = vextract.low.u32 %v2498
        %v2500 = vextract.high.u32 %v2498
        %v2501 = vmul.u32.u64.compose %v2497, %v2492
        %v2502 = vextract.low.u32 %v2501
        %v2503 = vextract.high.u32 %v2501
        %v2504 = vmul.u32 %v2497, %v2488
        %v2505 = vadd.s32 %v2500, %v2502
        %vm2506 = vc.u32 %v2500, %v2502
        %v2507 = vadd.s32 %v2503, 1
        %v2508 = vsel %vm2506, %v2507, %v2503
        %v2509 = vadd.s32 %v2504, %v2508
        %v2510 = vadd.s32 %v2509, 536870912
        %v2511 = vshrl.u32 %v2510, 30
        %v2512 = vshll.u32 %v2511, 30
        %v2513 = vsub.s32 %v2509, %v2512
        %vm2514 = vcmp.lt.s32.totalorder %v2513, 0
        %v2515 = vsub.s32 0, %v2513
        %v2516 = vsel %vm2514, %v2515, %v2513
        %v2517 = vclz %v2516
        %v2518 = vsub.s32 %v2517, 2
        %vm2519 = vcmp.gt.s32.totalorder 0, %v2518
        %v2520 = vsel %vm2519, 0, %v2518
        %v2521 = vsub.s32 32, %v2520
        %v2522 = vshll.u32 %v2513, %v2520
        %v2523 = vshrl.u32 %v2505, %v2521
        %v2524 = vor.u32 %v2522, %v2523
        %v2525 = vsub.s32 4294967266, %v2520
        %v2526 = vadd.s32 %v2525, 127
        %v2527 = vshll.u32 %v2526, 23
        %v2528 = vor.u32 4788187, %v2527
        %v2529 = vand.u32 2147483647, %v2528
        %v2531 = vcvt.s32.f32 %v2524
        %v2532 = vmul.f32 %v2531, %v2529
        %v2533 = vxor.u32 %v2532, 2147483648
        %v2534 = vsel %vm2451, %v2533, %v2532
        %v2535 = vsub.s32 4, %v2511
        %v2536 = vsel %vm2451, %v2535, %v2511
        %v2537 = vsel %vm2450, %v2134, %v2534
        %v2538 = vsel %vm2450, 0, %v2536
        %v2539 = vcosq.f32.pop %v2537
        %v2540 = vsinq.f32.pop %v2537
        %vm2541 = vweird.f32 %v2134
        %v2542 = vadd.s32 %v2538, 3
        %v2543 = vand.u32 %v2542, 3
        %vm2544 = vcmp.lt.s32.totalorder %v2543, 2
        %vm2545 = vcmp.eq.s32.totalorder %v2543, 0
        %v2546 = vxor.u32 %v2540, 2147483648
        %v2547 = vsel %vm2545, %v2539, %v2546
        %vm2548 = vcmp.eq.s32.totalorder %v2543, 2
        %v2549 = vxor.u32 %v2539, 2147483648
        %v2550 = vsel %vm2548, %v2549, %v2540
        %v2551 = vsel %vm2544, %v2547, %v2550
        %v2552 = vsel %vm2541, nan, %v2551
        %v2553 = vld [vmem:[%s9] sm:$0x3]
        %v2554 = vld [vmem:[%s10] sm:$0x3]
        %2556 = vset.pattern.permute.xlu0 0
        %2557 = vperm.xlu0 %2556, %v2554
        %v2558 = vpop.permute.xlu0 %2557
        %v2561 = vsel %vm957, %v2553, 0
        %2563 = vmatprep.subr.mxu0 0.0
        %2564 = vmatpush1.msra.mxu0 0.0
        %2565 = vmatprep.subr.mxu0 0.0
        %2566 = vmatpush1.msra.mxu0 0.0
        %2567 = vmatprep.subr.mxu0 0.0
        %2568 = vmatpush1.msra.mxu0 0.0
        %2569 = vmatprep.subr.mxu0 0.0
        %2570 = vmatpush1.msra.mxu0 0.0
        %2571 = vmatprep.subr.mxu0 0.0
        %2572 = vmatpush1.msra.mxu0 0.0
        %2573 = vmatprep.subr.mxu0 0.0
        %2574 = vmatpush1.msra.mxu0 0.0
        %2575 = vmatprep.subr.mxu0 0.0
        %2576 = vmatpush1.msra.mxu0 0.0
        %2577 = vmatprep.subr.mxu0 0.0
        %2578 = vmatpush1.msra.mxu0 0.0
        %2579 = vmatprep.subr.mxu0 0.0
        %2580 = vmatpush1.msra.mxu0 0.0
        %2581 = vmatprep.subr.mxu0 0.0
        %2582 = vmatpush1.msra.mxu0 0.0
        %2583 = vmatprep.subr.mxu0 0.0
        %2584 = vmatpush1.msra.mxu0 0.0
        %2585 = vmatprep.subr.mxu0 0.0
        %2586 = vmatpush1.msra.mxu0 0.0
        %2587 = vmatprep.subr.mxu0 0.0
        %2588 = vmatpush1.msra.mxu0 %v2552
        %2589 = vmatprep.subr.mxu0 0.0
        %2590 = vmatpush1.msra.mxu0 %v2448
        %2591 = vmatprep.subr.mxu0 0.0
        %2592 = vmatpush1.msra.mxu0 %v2344
        %2593 = vmatprep.subr.mxu0 0.0
        %2594 = vmatpush1.msra.mxu0 %v2240
        %2595 = vmatprep.subr.mxu0 0.0
        %2596 = vmatpush2.msra.mxu0 0.0
        %2597 = vmatprep.subr.mxu0 0.0
        %2598 = vmatpush2.msra.mxu0 0.0
        %2599 = vmatprep.subr.mxu0 0.0
        %2600 = vmatpush2.msra.mxu0 0.0
        %2601 = vmatprep.subr.mxu0 0.0
        %2602 = vmatpush2.msra.mxu0 0.0
        %2603 = vmatprep.subr.mxu0 0.0
        %2604 = vmatpush2.msra.mxu0 0.0
        %2605 = vmatprep.subr.mxu0 0.0
        %2606 = vmatpush2.msra.mxu0 0.0
        %2607 = vmatprep.subr.mxu0 0.0
        %2608 = vmatpush2.msra.mxu0 0.0
        %2609 = vmatprep.subr.mxu0 0.0
        %2610 = vmatpush2.msra.mxu0 0.0
        %2611 = vmatprep.subr.mxu0 0.0
        %2612 = vmatpush2.msra.mxu0 0.0
        %2613 = vmatprep.subr.mxu0 0.0
        %2614 = vmatpush2.msra.mxu0 0.0
        %2615 = vmatprep.subr.mxu0 0.0
        %2616 = vmatpush2.msra.mxu0 0.0
        %2617 = vmatprep.subr.mxu0 0.0
        %2618 = vmatpush2.msra.mxu0 0.0
        %2619 = vmatprep.subr.mxu0 0.0
        %2620 = vmatpush2.msra.mxu0 0.0
        %2621 = vmatprep.subr.mxu0 0.0
        %2622 = vmatpush2.msra.mxu0 0.0
        %2623 = vmatprep.subr.mxu0 0.0
        %2624 = vmatpush2.msra.mxu0 0.0
        %2625 = vmatprep.subr.mxu0 0.0
        %2626 = vmatpush2.msra.mxu0 0.0
        %2627 = vmatprep.mubr.f32.mxu0 0.0
        %2628 = vmatmul.mubr.f32.gmra.mxu0 %v2561
        %v2629 = vpop.f32.mrf.mxu0
        %v2630 = vadd.f32 %v2558, %v2629
        %v2631 = vpop.f32.mrf.mxu0
        %2632 = vdwg.mxu0
        %2633 = vst [vmem:[%s377] sm:$0x3] %v2630
        %s2634 = sand.u32 %s269, 1
        %s2635 = scalar_lea.sflag [#allocation3], %s2634
        %s2636 = sand.u32 %s269, 1
        %s2637 = smul.addr %s2636, 2
        %s2638 = scalar_lea.vmem [#allocation2], %s2637
        // Predicated region
        $region65: #{tpu_custom_call.1} parent=63 // pred_check
          %p2639 = pneg %p279
        $region66: #{tpu_custom_call.1} parent=63 // pred_check_branch
          %2641 = sbr.rel (%p2639) target = $region68
        $region67: #{tpu_custom_call.1} parent=63 // pred_region
          %s2643 = ssub.s32 32, 32
          %2644 = vsyncadd %s2635, %s2643
          %s2645 = smul.addr %s25, 32
          %s2646 = scalar_lea.hbm %s11, %s2645
          %s2648 = sshll.u32 %s2638, 4
          %s2649 = int_to_ptr.vmem [resolvable:$true] %s2648
          %2651 = dma.vmem_to_hbm [thread:$0]  %s2649, 32, %s2646, %s2635
        $region68: #{tpu_custom_call.1} parent=63 // pred_fallthru
          _
      $region64: #{tpu_custom_call.1} parent=5 // pred_fallthru
        _
      %p2652 = scmp.le.s32.totalorder 2, %s20
      // Predicated region
      $region69: #{tpu_custom_call.1} parent=5 // pred_check
        %p2653 = pneg %p2652
      $region70: #{tpu_custom_call.1} parent=5 // pred_check_branch
        %2655 = sbr.rel (%p2653) target = $region72
      $region71: #{tpu_custom_call.1} parent=5 // pred_region
        %s2656 = ssub.s32 %s20, 2
        // Predicated region
        $region73: #{tpu_custom_call.1} parent=71 // pred_check
          %p2657 = pneg %p285
        $region74: #{tpu_custom_call.1} parent=71 // pred_check_branch
          %2659 = sbr.rel (%p2657) target = $region76
        $region75: #{tpu_custom_call.1} parent=71 // pred_region
          %s2660 = sand.u32 %s270, 1
          %s2661 = scalar_lea.sflag [#allocation3], %s2660
          %s2662 = sand.u32 %s270, 1
          %s2663 = smul.addr %s2662, 2
          %s2664 = scalar_lea.vmem [#allocation2], %s2663
          %2665 = dma.done %s2661, 32
        $region76: #{tpu_custom_call.1} parent=71 // pred_fallthru
          _
      $region72: #{tpu_custom_call.1} parent=5 // pred_fallthru
        _
    $region6: #{tpu_custom_call.1} parent=1 // loop_footer
      %s24 = sadd.s32 1, %s20
    $region7: #{tpu_custom_call.1} parent=1 // loop_footer_branch
      %19 = sbr.rel target = $region3
    $region8: #{tpu_custom_call.1} parent=1 // loop_exit
      _
    %2666 = vsyncpa [#allocation3], 1
    %s2667 = scalar_lea.sflag [#allocation3], 1
    %2668 = vsyncpa %s2667, 1

</llo_original>
